<compile_context>
chip_gen: v6e
topology: v6e:2x2x1
jax: 0.10.0
libtpu: 0.0.40
codegen_flags: <defaults>
</compile_context>

<pallas_src>
import math

import jax
import jax.numpy as jnp
from jax.experimental import pallas as pl
from jax.experimental.pallas import tpu as pltpu

# --- "config" (small, consistent with the module) -------------------------
BATCH = 2
SEQ = 8
HIDDEN = 32
NUM_HEADS = 4
HEAD_DIM = HIDDEN // NUM_HEADS
INTERMEDIATE = 64          # config.intermediate_size
NUM_LAYERS = 2             # config.num_hidden_layers
OUTPUT_ALL_ENCODED_LAYERS = True
LN_EPS = 1e-12

# order of the stacked per-layer parameter arrays handed to the kernel
PACKED_ORDER = ["wqkv", "bqkv", "wo", "bo", "ln1_g", "ln1_b",
                "wi", "bi", "w2", "b2", "ln2_g", "ln2_b"]


def _layer_norm(x, gamma, beta):
    mean = jnp.mean(x, axis=-1, keepdims=True)
    var = jnp.mean((x - mean) ** 2, axis=-1, keepdims=True)
    return (x - mean) * jax.lax.rsqrt(var + LN_EPS) * gamma + beta


def _gelu_exact(x):
    # exact-erf GELU (matches torch F.gelu default used by bias_gelu)
    return x * 0.5 * (1.0 + jax.lax.erf(x * (1.0 / math.sqrt(2.0))))


def bert_encoder_kernel(h_in_ref, mask_ref,
                        wqkv_ref, bqkv_ref,
                        wo_ref, bo_ref, ln1_g_ref, ln1_b_ref,
                        wi_ref, bi_ref, w2_ref, b2_ref, ln2_g_ref, ln2_b_ref,
                        out_ref, h_scr):
    """One grid step == one BertLayer.  Hidden state lives in VMEM scratch."""

    @pl.when(pl.program_id(0) == 0)
    def _():
        h_scr[...] = h_in_ref[...].astype(jnp.float32).reshape(
            BATCH * SEQ, HIDDEN)

    h2 = h_scr[...]                                  # (B*S, H) f32 residual in
    mask = mask_ref[...]                             # (B, 1, S) additive mask

    # --- BertSelfAttention: fused QKV projection (single MXU push) ---------
    qkv = jnp.dot(h2.astype(jnp.bfloat16), wqkv_ref[0],
                  preferred_element_type=jnp.float32) + bqkv_ref[0]   # (B*S,3H)
    q = qkv[:, 0 * HIDDEN:1 * HIDDEN].reshape(BATCH, SEQ, HIDDEN)
    k = qkv[:, 1 * HIDDEN:2 * HIDDEN].reshape(BATCH, SEQ, HIDDEN)
    v = qkv[:, 2 * HIDDEN:3 * HIDDEN].reshape(BATCH, SEQ, HIDDEN)

    scale = 1.0 / math.sqrt(HEAD_DIM)
    attn2 = jnp.zeros((BATCH * SEQ, HIDDEN), jnp.float32)
    for hd in range(NUM_HEADS):                      # static unrolled head loop
        sl = slice(hd * HEAD_DIM, (hd + 1) * HEAD_DIM)
        q_h = q[:, :, sl].astype(jnp.bfloat16)       # (B, S, dH)
        k_h = k[:, :, sl].astype(jnp.bfloat16)
        v_h = v[:, :, sl].astype(jnp.bfloat16)
        scores = jnp.einsum('bqd,bkd->bqk', q_h, k_h,
                            preferred_element_type=jnp.float32) * scale
        scores = scores + mask                       # broadcast over query dim
        scores = scores - jnp.max(scores, axis=-1, keepdims=True)
        e = jnp.exp(scores)
        probs = e * pl.reciprocal(jnp.sum(e, axis=-1, keepdims=True),
                                  approx=True)
        # attention dropout: identity in eval mode
        ctx = jnp.einsum('bqk,bkd->bqd', probs.astype(jnp.bfloat16), v_h,
                         preferred_element_type=jnp.float32)
        # Fold this head's slice of the output projection straight into the
        # accumulator -- equivalent to concat(heads) @ Wo, no lane concat.
        attn2 = attn2 + jnp.dot(
            ctx.reshape(BATCH * SEQ, HEAD_DIM).astype(jnp.bfloat16),
            wo_ref[0, hd], preferred_element_type=jnp.float32)

    # --- BertSelfOutput: dense bias + (dropout=id) + residual + LayerNorm ---
    attn2 = _layer_norm(attn2 + bo_ref[0] + h2, ln1_g_ref[0], ln1_b_ref[0])

    # --- BertIntermediate: LinearActivation('gelu') -> bias_gelu ------------
    inter = jnp.dot(attn2.astype(jnp.bfloat16), wi_ref[0],
                    preferred_element_type=jnp.float32) + bi_ref[0]
    inter = _gelu_exact(inter)

    # --- BertOutput: dense + (dropout=id) + residual + LayerNorm ------------
    out2 = jnp.dot(inter.astype(jnp.bfloat16), w2_ref[0],
                   preferred_element_type=jnp.float32) + b2_ref[0]
    out2 = _layer_norm(out2 + attn2, ln2_g_ref[0], ln2_b_ref[0])

    h_scr[...] = out2                                # carry to next layer
    out_ref[0] = out2.reshape(BATCH, SEQ, HIDDEN).astype(out_ref.dtype)


# --- wrapper: pack / stack params and launch one fused pallas_call ---------
def _stack(layer_params, name, dtype):
    return jnp.stack([p[name] for p in layer_params], axis=0).astype(dtype)


def pack_encoder_params(layer_params):
    wqkv = jnp.stack(
        [jnp.concatenate([p["wq"], p["wk"], p["wv"]], axis=1)
         for p in layer_params], axis=0).astype(jnp.bfloat16)       # (L,H,3H)
    bqkv = jnp.stack(
        [jnp.concatenate([p["bq"], p["bk"], p["bv"]], axis=1)
         for p in layer_params], axis=0).astype(jnp.float32)        # (L,1,3H)
    # Wo pre-split per head: (L, NH, dH, H) -> kernel indexes heads for free.
    wo = jnp.stack(
        [p["wo"].reshape(NUM_HEADS, HEAD_DIM, HIDDEN) for p in layer_params],
        axis=0).astype(jnp.bfloat16)
    return {
        "wqkv": wqkv, "bqkv": bqkv, "wo": wo,
        "bo": _stack(layer_params, "bo", jnp.float32),
        "ln1_g": _stack(layer_params, "ln1_g", jnp.float32),
        "ln1_b": _stack(layer_params, "ln1_b", jnp.float32),
        "wi": _stack(layer_params, "wi", jnp.bfloat16),
        "bi": _stack(layer_params, "bi", jnp.float32),
        "w2": _stack(layer_params, "w2", jnp.bfloat16),
        "b2": _stack(layer_params, "b2", jnp.float32),
        "ln2_g": _stack(layer_params, "ln2_g", jnp.float32),
        "ln2_b": _stack(layer_params, "ln2_b", jnp.float32),
    }


def bert_encoder_forward(hidden_states, attention_mask, layer_params):
    """Mirrors BertEncoder.forward: returns a list of encoded layers."""
    B, S, H = hidden_states.shape
    L = len(layer_params)
    packed = pack_encoder_params(layer_params)

    def full_spec(shape):                      # invariant input, never refetched
        nd = len(shape)
        return pl.BlockSpec(shape, lambda l, _nd=nd: (0,) * _nd)

    def layer_spec(shape):                     # per-layer stacked param
        nd = len(shape)
        return pl.BlockSpec((1,) + tuple(shape[1:]),
                            lambda l, _nd=nd: (l,) + (0,) * (_nd - 1))

    in_specs = [full_spec(hidden_states.shape), full_spec(attention_mask.shape)]
    args = [hidden_states, attention_mask]
    for name in PACKED_ORDER:
        arr = packed[name]
        in_specs.append(layer_spec(arr.shape))
        args.append(arr)

    out = pl.pallas_call(
        bert_encoder_kernel,
        out_shape=jax.ShapeDtypeStruct((L, B, S, H), hidden_states.dtype),
        grid=(L,),
        in_specs=in_specs,
        out_specs=pl.BlockSpec((1, B, S, H), lambda l: (l, 0, 0, 0)),
        scratch_shapes=[pltpu.VMEM((B * S, H), jnp.float32)],
        compiler_params=pltpu.CompilerParams(
            dimension_semantics=("arbitrary",)),   # layers are sequential
    )(*args)

    if OUTPUT_ALL_ENCODED_LAYERS:
        return [out[i] for i in range(L)]
    return [out[L - 1]]


# --- deterministic parameter init (shapes from the module's __init__) ------
def _linear(key, fan_in, fan_out):
    kw, kb = jax.random.split(key)
    bound = 1.0 / math.sqrt(fan_in)
    w = jax.random.uniform(kw, (fan_in, fan_out), jnp.float32, -bound, bound)
    b = jax.random.uniform(kb, (1, fan_out), jnp.float32, -bound, bound)
    return w, b


def init_layer_params(key):
    ks = jax.random.split(key, 6)
    p = {}
    p["wq"], p["bq"] = _linear(ks[0], HIDDEN, HIDDEN)
    p["wk"], p["bk"] = _linear(ks[1], HIDDEN, HIDDEN)
    p["wv"], p["bv"] = _linear(ks[2], HIDDEN, HIDDEN)
    p["wo"], p["bo"] = _linear(ks[3], HIDDEN, HIDDEN)
    p["ln1_g"] = jnp.ones((1, HIDDEN), jnp.float32)
    p["ln1_b"] = jnp.zeros((1, HIDDEN), jnp.float32)
    p["wi"], p["bi"] = _linear(ks[4], HIDDEN, INTERMEDIATE)
    p["w2"], p["b2"] = _linear(ks[5], INTERMEDIATE, HIDDEN)
    p["ln2_g"] = jnp.ones((1, HIDDEN), jnp.float32)
    p["ln2_b"] = jnp.zeros((1, HIDDEN), jnp.float32)
    return p


# --- pure-JAX f32 reference of the module (for a loose sanity check) -------
def _reference_encoder(h, mask, layer_params):
    outs = []
    for p in layer_params:
        B, S, H = h.shape
        x = h.reshape(B * S, H)
        q = x @ p["wq"] + p["bq"]
        k = x @ p["wk"] + p["bk"]
        v = x @ p["wv"] + p["bv"]

        def split_heads(t):
            return t.reshape(B, S, NUM_HEADS, HEAD_DIM).transpose(0, 2, 1, 3)

        qh, kh, vh = split_heads(q), split_heads(k), split_heads(v)
        scores = jnp.einsum('bhqd,bhkd->bhqk', qh, kh) / math.sqrt(HEAD_DIM)
        scores = scores + mask[:, None, :, :]
        probs = jax.nn.softmax(scores, axis=-1)
        ctx = jnp.einsum('bhqk,bhkd->bhqd', probs, vh)
        ctx = ctx.transpose(0, 2, 1, 3).reshape(B * S, H)
        attn = _layer_norm(ctx @ p["wo"] + p["bo"] + x, p["ln1_g"], p["ln1_b"])
        inter = _gelu_exact(attn @ p["wi"] + p["bi"])
        out = _layer_norm(inter @ p["w2"] + p["b2"] + attn,
                          p["ln2_g"], p["ln2_b"])
        h = out.reshape(B, S, H)
        outs.append(h)
    return outs


if __name__ == "__main__":
    root = jax.random.PRNGKey(0)
    k_h, k_params = jax.random.split(root)

    hidden_states = 0.02 * jax.random.normal(
        k_h, (BATCH, SEQ, HIDDEN), jnp.float32)

    # HF-style additive attention mask: (1 - mask) * -10000, logical shape
    # (B,1,1,S), handed to the kernel squeezed to (B, 1, S).
    attn_mask_bool = jnp.ones((BATCH, SEQ), jnp.float32)
    additive_mask = ((1.0 - attn_mask_bool) * -10000.0).reshape(BATCH, 1, SEQ)

    layer_params = [
        init_layer_params(jax.random.fold_in(k_params, i))
        for i in range(NUM_LAYERS)
    ]

    outs = bert_encoder_forward(hidden_states, additive_mask, layer_params)
    for o in outs:
        jax.block_until_ready(o)

    assert outs[-1].shape == (BATCH, SEQ, HIDDEN)
    assert len(outs) == (NUM_LAYERS if OUTPUT_ALL_ENCODED_LAYERS else 1)

    # loose tolerance: kernel uses bf16 matmul operands (f32 accumulation)
    refs = _reference_encoder(hidden_states, additive_mask, layer_params)
    for got, ref in zip(outs, refs):
        max_err = float(jnp.max(jnp.abs(got - ref)))
        assert max_err < 1e-1, f"max abs err {max_err}"

    print("KERNEL_OK")
</pallas_src>

<mosaic_0001>
module attributes {stable_mosaic.version = 11 : i64} {
  func.func @bert_encoder_kernel(%arg0: i32, %arg1: memref<2x8x32xf32, #tpu.memory_space<vmem>>, %arg2: memref<2x1x8xf32, #tpu.memory_space<vmem>>, %arg3: memref<1x32x96xbf16, #tpu.memory_space<vmem>>, %arg4: memref<1x1x96xf32, #tpu.memory_space<vmem>>, %arg5: memref<1x4x8x32xbf16, #tpu.memory_space<vmem>>, %arg6: memref<1x1x32xf32, #tpu.memory_space<vmem>>, %arg7: memref<1x1x32xf32, #tpu.memory_space<vmem>>, %arg8: memref<1x1x32xf32, #tpu.memory_space<vmem>>, %arg9: memref<1x32x64xbf16, #tpu.memory_space<vmem>>, %arg10: memref<1x1x64xf32, #tpu.memory_space<vmem>>, %arg11: memref<1x64x32xbf16, #tpu.memory_space<vmem>>, %arg12: memref<1x1x32xf32, #tpu.memory_space<vmem>>, %arg13: memref<1x1x32xf32, #tpu.memory_space<vmem>>, %arg14: memref<1x1x32xf32, #tpu.memory_space<vmem>>, %arg15: memref<1x2x8x32xf32, #tpu.memory_space<vmem>>, %arg16: memref<16x32xf32, #tpu.memory_space<vmem>>) attributes {dimension_semantics = [#tpu.dimension_semantics<arbitrary>], iteration_bounds = array<i64: 2>, scalar_prefetch = 0 : i64, scratch_operands = 1 : i64, tpu.core_type = #tpu.core_type<tc>, window_params = [{pipeline_mode = #tpu.pipeline_mode<synchronous>, transform_indices = @transform_0, window_bounds = array<i64: 2, 8, 32>}, {pipeline_mode = #tpu.pipeline_mode<synchronous>, transform_indices = @transform_1, window_bounds = array<i64: 2, 1, 8>}, {transform_indices = @transform_2, window_bounds = array<i64: 1, 32, 96>}, {transform_indices = @transform_3, window_bounds = array<i64: 1, 1, 96>}, {transform_indices = @transform_4, window_bounds = array<i64: 1, 4, 8, 32>}, {transform_indices = @transform_5, window_bounds = array<i64: 1, 1, 32>}, {transform_indices = @transform_6, window_bounds = array<i64: 1, 1, 32>}, {transform_indices = @transform_7, window_bounds = array<i64: 1, 1, 32>}, {transform_indices = @transform_8, window_bounds = array<i64: 1, 32, 64>}, {transform_indices = @transform_9, window_bounds = array<i64: 1, 1, 64>}, {transform_indices = @transform_10, window_bounds = array<i64: 1, 64, 32>}, {transform_indices = @transform_11, window_bounds = array<i64: 1, 1, 32>}, {transform_indices = @transform_12, window_bounds = array<i64: 1, 1, 32>}, {transform_indices = @transform_13, window_bounds = array<i64: 1, 1, 32>}, {transform_indices = @transform_14, window_bounds = array<i64: 1, 2, 8, 32>}]} {
    %c0_i32 = arith.constant 0 : i32
    %0 = arith.cmpi eq, %arg0, %c0_i32 : i32
    %1 = arith.extui %0 : i1 to i32
    %c0_i32_0 = arith.constant 0 : i32
    %2 = arith.cmpi ne, %1, %c0_i32_0 : i32
    scf.if %2 {
      %c0_97 = arith.constant 0 : index
      %c0_98 = arith.constant 0 : index
      %c0_99 = arith.constant 0 : index
      %223 = vector.load %arg1[%c0_97, %c0_98, %c0_99] : memref<2x8x32xf32, #tpu.memory_space<vmem>>, vector<2x8x32xf32>
      %224 = vector.shape_cast %223 : vector<2x8x32xf32> to vector<16x32xf32>
      %c0_100 = arith.constant 0 : index
      %c0_101 = arith.constant 0 : index
      %225 = vector.load %arg16[%c0_100, %c0_101] : memref<16x32xf32, #tpu.memory_space<vmem>>, vector<16x32xf32>
      tpu.vector_store %arg16[%c0_100, %c0_101], %224 {strides = array<i32>} : memref<16x32xf32, #tpu.memory_space<vmem>>, vector<16x32xf32>,
    } else {
    }
    %c0 = arith.constant 0 : index
    %c0_1 = arith.constant 0 : index
    %3 = vector.load %arg16[%c0, %c0_1] : memref<16x32xf32, #tpu.memory_space<vmem>>, vector<16x32xf32>
    %c0_2 = arith.constant 0 : index
    %c0_3 = arith.constant 0 : index
    %c0_4 = arith.constant 0 : index
    %4 = vector.load %arg2[%c0_2, %c0_3, %c0_4] : memref<2x1x8xf32, #tpu.memory_space<vmem>>, vector<2x1x8xf32>
    %5 = arith.truncf %3 : vector<16x32xf32> to vector<16x32xbf16>
    %c0_5 = arith.constant 0 : index
    %c0_6 = arith.constant 0 : index
    %c0_7 = arith.constant 0 : index
    %6 = vector.load %arg3[%c0_5, %c0_6, %c0_7] : memref<1x32x96xbf16, #tpu.memory_space<vmem>>, vector<1x32x96xbf16>
    %7 = vector.shape_cast %6 : vector<1x32x96xbf16> to vector<32x96xbf16>
    %cst = arith.constant dense<0.000000e+00> : vector<16x96xf32>
    %8 = tpu.matmul %5, %7, %cst {dimension_numbers = #tpu.dot_dimension_numbers<[1], [0], [0], [1], [0, 0, 1, 1], [], []>} : vector<16x32xbf16>, vector<32x96xbf16>, vector<16x96xf32> -> vector<16x96xf32>
    %c0_8 = arith.constant 0 : index
    %c0_9 = arith.constant 0 : index
    %c0_10 = arith.constant 0 : index
    %9 = vector.load %arg4[%c0_8, %c0_9, %c0_10] : memref<1x1x96xf32, #tpu.memory_space<vmem>>, vector<1x1x96xf32>
    %10 = vector.shape_cast %9 : vector<1x1x96xf32> to vector<1x96xf32>
    %11 = vector.broadcast %10 : vector<1x96xf32> to vector<16x96xf32>
    %12 = arith.addf %8, %11 : vector<16x96xf32>
    %13 = vector.extract_strided_slice %12 {offsets = [0, 0], sizes = [16, 32], strides = [1, 1]} : vector<16x96xf32> to vector<16x32xf32>
    %14 = vector.shape_cast %13 : vector<16x32xf32> to vector<2x8x32xf32>
    %15 = vector.extract_strided_slice %12 {offsets = [0, 32], sizes = [16, 32], strides = [1, 1]} : vector<16x96xf32> to vector<16x32xf32>
    %16 = vector.shape_cast %15 : vector<16x32xf32> to vector<2x8x32xf32>
    %17 = vector.extract_strided_slice %12 {offsets = [0, 64], sizes = [16, 32], strides = [1, 1]} : vector<16x96xf32> to vector<16x32xf32>
    %18 = vector.shape_cast %17 : vector<16x32xf32> to vector<2x8x32xf32>
    %cst_11 = arith.constant 0.000000e+00 : f32
    %19 = vector.broadcast %cst_11 : f32 to vector<16x32xf32>
    %20 = vector.extract_strided_slice %14 {offsets = [0, 0, 0], sizes = [2, 8, 8], strides = [1, 1, 1]} : vector<2x8x32xf32> to vector<2x8x8xf32>
    %21 = arith.truncf %20 : vector<2x8x8xf32> to vector<2x8x8xbf16>
    %22 = vector.extract_strided_slice %16 {offsets = [0, 0, 0], sizes = [2, 8, 8], strides = [1, 1, 1]} : vector<2x8x32xf32> to vector<2x8x8xf32>
    %23 = arith.truncf %22 : vector<2x8x8xf32> to vector<2x8x8xbf16>
    %24 = vector.extract_strided_slice %18 {offsets = [0, 0, 0], sizes = [2, 8, 8], strides = [1, 1, 1]} : vector<2x8x32xf32> to vector<2x8x8xf32>
    %25 = arith.truncf %24 : vector<2x8x8xf32> to vector<2x8x8xbf16>
    "tpu.trace_start"() <{level = 10 : i32, message = "bqd,bkd->bqk"}> : () -> ()
    %cst_12 = arith.constant dense<0.000000e+00> : vector<2x8x8xf32>
    %26 = tpu.matmul %21, %23, %cst_12 {dimension_numbers = #tpu.dot_dimension_numbers<[2], [2], [1], [1], [0, 0, 0, 1, 1, 1], [0], [0]>} : vector<2x8x8xbf16>, vector<2x8x8xbf16>, vector<2x8x8xf32> -> vector<2x8x8xf32>
    "tpu.trace_stop"() : () -> ()
    %cst_13 = arith.constant 0.353553385 : f32
    %27 = vector.broadcast %cst_13 : f32 to vector<2x8x8xf32>
    %28 = arith.mulf %26, %27 : vector<2x8x8xf32>
    %29 = vector.broadcast %4 : vector<2x1x8xf32> to vector<2x8x8xf32>
    %30 = arith.addf %28, %29 : vector<2x8x8xf32>
    %cst_14 = arith.constant dense<0xFF800000> : vector<2x8xf32>
    %31 = vector.multi_reduction <maximumf>, %30, %cst_14 [2] : vector<2x8x8xf32> to vector<2x8xf32>
    %32 = vector.shape_cast %31 : vector<2x8xf32> to vector<2x8x1xf32>
    %33 = vector.broadcast %32 : vector<2x8x1xf32> to vector<2x8x8xf32>
    %34 = arith.subf %30, %33 : vector<2x8x8xf32>
    %35 = math.exp %34 : vector<2x8x8xf32>
    %cst_15 = arith.constant dense<0.000000e+00> : vector<2x8xf32>
    %36 = vector.multi_reduction <add>, %35, %cst_15 [2] : vector<2x8x8xf32> to vector<2x8xf32>
    %37 = vector.shape_cast %36 : vector<2x8xf32> to vector<2x8x1xf32>
    %38 = tpu.reciprocal %37 {approx = true} : vector<2x8x1xf32> -> vector<2x8x1xf32>
    %39 = vector.broadcast %38 : vector<2x8x1xf32> to vector<2x8x8xf32>
    %40 = arith.mulf %35, %39 : vector<2x8x8xf32>
    %41 = arith.truncf %40 : vector<2x8x8xf32> to vector<2x8x8xbf16>
    "tpu.trace_start"() <{level = 10 : i32, message = "bqk,bkd->bqd"}> : () -> ()
    %cst_16 = arith.constant dense<0.000000e+00> : vector<2x8x8xf32>
    %42 = tpu.matmul %41, %25, %cst_16 {dimension_numbers = #tpu.dot_dimension_numbers<[2], [1], [1], [2], [0, 0, 0, 1, 1, 2], [0], [0]>} : vector<2x8x8xbf16>, vector<2x8x8xbf16>, vector<2x8x8xf32> -> vector<2x8x8xf32>
    "tpu.trace_stop"() : () -> ()
    %43 = vector.shape_cast %42 : vector<2x8x8xf32> to vector<16x8xf32>
    %44 = arith.truncf %43 : vector<16x8xf32> to vector<16x8xbf16>
    %c0_17 = arith.constant 0 : index
    %c0_18 = arith.constant 0 : index
    %c0_19 = arith.constant 0 : index
    %c0_20 = arith.constant 0 : index
    %45 = vector.load %arg5[%c0_17, %c0_18, %c0_19, %c0_20] : memref<1x4x8x32xbf16, #tpu.memory_space<vmem>>, vector<1x1x8x32xbf16>
    %46 = vector.shape_cast %45 : vector<1x1x8x32xbf16> to vector<8x32xbf16>
    %cst_21 = arith.constant dense<0.000000e+00> : vector<16x32xf32>
    %47 = tpu.matmul %44, %46, %cst_21 {dimension_numbers = #tpu.dot_dimension_numbers<[1], [0], [0], [1], [0, 0, 1, 1], [], []>} : vector<16x8xbf16>, vector<8x32xbf16>, vector<16x32xf32> -> vector<16x32xf32>
    %48 = arith.addf %19, %47 : vector<16x32xf32>
    %49 = vector.extract_strided_slice %14 {offsets = [0, 0, 8], sizes = [2, 8, 8], strides = [1, 1, 1]} : vector<2x8x32xf32> to vector<2x8x8xf32>
    %50 = arith.truncf %49 : vector<2x8x8xf32> to vector<2x8x8xbf16>
    %51 = vector.extract_strided_slice %16 {offsets = [0, 0, 8], sizes = [2, 8, 8], strides = [1, 1, 1]} : vector<2x8x32xf32> to vector<2x8x8xf32>
    %52 = arith.truncf %51 : vector<2x8x8xf32> to vector<2x8x8xbf16>
    %53 = vector.extract_strided_slice %18 {offsets = [0, 0, 8], sizes = [2, 8, 8], strides = [1, 1, 1]} : vector<2x8x32xf32> to vector<2x8x8xf32>
    %54 = arith.truncf %53 : vector<2x8x8xf32> to vector<2x8x8xbf16>
    "tpu.trace_start"() <{level = 10 : i32, message = "bqd,bkd->bqk"}> : () -> ()
    %cst_22 = arith.constant dense<0.000000e+00> : vector<2x8x8xf32>
    %55 = tpu.matmul %50, %52, %cst_22 {dimension_numbers = #tpu.dot_dimension_numbers<[2], [2], [1], [1], [0, 0, 0, 1, 1, 1], [0], [0]>} : vector<2x8x8xbf16>, vector<2x8x8xbf16>, vector<2x8x8xf32> -> vector<2x8x8xf32>
    "tpu.trace_stop"() : () -> ()
    %cst_23 = arith.constant 0.353553385 : f32
    %56 = vector.broadcast %cst_23 : f32 to vector<2x8x8xf32>
    %57 = arith.mulf %55, %56 : vector<2x8x8xf32>
    %58 = vector.broadcast %4 : vector<2x1x8xf32> to vector<2x8x8xf32>
    %59 = arith.addf %57, %58 : vector<2x8x8xf32>
    %cst_24 = arith.constant dense<0xFF800000> : vector<2x8xf32>
    %60 = vector.multi_reduction <maximumf>, %59, %cst_24 [2] : vector<2x8x8xf32> to vector<2x8xf32>
    %61 = vector.shape_cast %60 : vector<2x8xf32> to vector<2x8x1xf32>
    %62 = vector.broadcast %61 : vector<2x8x1xf32> to vector<2x8x8xf32>
    %63 = arith.subf %59, %62 : vector<2x8x8xf32>
    %64 = math.exp %63 : vector<2x8x8xf32>
    %cst_25 = arith.constant dense<0.000000e+00> : vector<2x8xf32>
    %65 = vector.multi_reduction <add>, %64, %cst_25 [2] : vector<2x8x8xf32> to vector<2x8xf32>
    %66 = vector.shape_cast %65 : vector<2x8xf32> to vector<2x8x1xf32>
    %67 = tpu.reciprocal %66 {approx = true} : vector<2x8x1xf32> -> vector<2x8x1xf32>
    %68 = vector.broadcast %67 : vector<2x8x1xf32> to vector<2x8x8xf32>
    %69 = arith.mulf %64, %68 : vector<2x8x8xf32>
    %70 = arith.truncf %69 : vector<2x8x8xf32> to vector<2x8x8xbf16>
    "tpu.trace_start"() <{level = 10 : i32, message = "bqk,bkd->bqd"}> : () -> ()
    %cst_26 = arith.constant dense<0.000000e+00> : vector<2x8x8xf32>
    %71 = tpu.matmul %70, %54, %cst_26 {dimension_numbers = #tpu.dot_dimension_numbers<[2], [1], [1], [2], [0, 0, 0, 1, 1, 2], [0], [0]>} : vector<2x8x8xbf16>, vector<2x8x8xbf16>, vector<2x8x8xf32> -> vector<2x8x8xf32>
    "tpu.trace_stop"() : () -> ()
    %72 = vector.shape_cast %71 : vector<2x8x8xf32> to vector<16x8xf32>
    %73 = arith.truncf %72 : vector<16x8xf32> to vector<16x8xbf16>
    %c0_27 = arith.constant 0 : index
    %c1 = arith.constant 1 : index
    %c0_28 = arith.constant 0 : index
    %c0_29 = arith.constant 0 : index
    %74 = vector.load %arg5[%c0_27, %c1, %c0_28, %c0_29] : memref<1x4x8x32xbf16, #tpu.memory_space<vmem>>, vector<1x1x8x32xbf16>
    %75 = vector.shape_cast %74 : vector<1x1x8x32xbf16> to vector<8x32xbf16>
    %cst_30 = arith.constant dense<0.000000e+00> : vector<16x32xf32>
    %76 = tpu.matmul %73, %75, %cst_30 {dimension_numbers = #tpu.dot_dimension_numbers<[1], [0], [0], [1], [0, 0, 1, 1], [], []>} : vector<16x8xbf16>, vector<8x32xbf16>, vector<16x32xf32> -> vector<16x32xf32>
    %77 = arith.addf %48, %76 : vector<16x32xf32>
    %78 = vector.extract_strided_slice %14 {offsets = [0, 0, 16], sizes = [2, 8, 8], strides = [1, 1, 1]} : vector<2x8x32xf32> to vector<2x8x8xf32>
    %79 = arith.truncf %78 : vector<2x8x8xf32> to vector<2x8x8xbf16>
    %80 = vector.extract_strided_slice %16 {offsets = [0, 0, 16], sizes = [2, 8, 8], strides = [1, 1, 1]} : vector<2x8x32xf32> to vector<2x8x8xf32>
    %81 = arith.truncf %80 : vector<2x8x8xf32> to vector<2x8x8xbf16>
    %82 = vector.extract_strided_slice %18 {offsets = [0, 0, 16], sizes = [2, 8, 8], strides = [1, 1, 1]} : vector<2x8x32xf32> to vector<2x8x8xf32>
    %83 = arith.truncf %82 : vector<2x8x8xf32> to vector<2x8x8xbf16>
    "tpu.trace_start"() <{level = 10 : i32, message = "bqd,bkd->bqk"}> : () -> ()
    %cst_31 = arith.constant dense<0.000000e+00> : vector<2x8x8xf32>
    %84 = tpu.matmul %79, %81, %cst_31 {dimension_numbers = #tpu.dot_dimension_numbers<[2], [2], [1], [1], [0, 0, 0, 1, 1, 1], [0], [0]>} : vector<2x8x8xbf16>, vector<2x8x8xbf16>, vector<2x8x8xf32> -> vector<2x8x8xf32>
    "tpu.trace_stop"() : () -> ()
    %cst_32 = arith.constant 0.353553385 : f32
    %85 = vector.broadcast %cst_32 : f32 to vector<2x8x8xf32>
    %86 = arith.mulf %84, %85 : vector<2x8x8xf32>
    %87 = vector.broadcast %4 : vector<2x1x8xf32> to vector<2x8x8xf32>
    %88 = arith.addf %86, %87 : vector<2x8x8xf32>
    %cst_33 = arith.constant dense<0xFF800000> : vector<2x8xf32>
    %89 = vector.multi_reduction <maximumf>, %88, %cst_33 [2] : vector<2x8x8xf32> to vector<2x8xf32>
    %90 = vector.shape_cast %89 : vector<2x8xf32> to vector<2x8x1xf32>
    %91 = vector.broadcast %90 : vector<2x8x1xf32> to vector<2x8x8xf32>
    %92 = arith.subf %88, %91 : vector<2x8x8xf32>
    %93 = math.exp %92 : vector<2x8x8xf32>
    %cst_34 = arith.constant dense<0.000000e+00> : vector<2x8xf32>
    %94 = vector.multi_reduction <add>, %93, %cst_34 [2] : vector<2x8x8xf32> to vector<2x8xf32>
    %95 = vector.shape_cast %94 : vector<2x8xf32> to vector<2x8x1xf32>
    %96 = tpu.reciprocal %95 {approx = true} : vector<2x8x1xf32> -> vector<2x8x1xf32>
    %97 = vector.broadcast %96 : vector<2x8x1xf32> to vector<2x8x8xf32>
    %98 = arith.mulf %93, %97 : vector<2x8x8xf32>
    %99 = arith.truncf %98 : vector<2x8x8xf32> to vector<2x8x8xbf16>
    "tpu.trace_start"() <{level = 10 : i32, message = "bqk,bkd->bqd"}> : () -> ()
    %cst_35 = arith.constant dense<0.000000e+00> : vector<2x8x8xf32>
    %100 = tpu.matmul %99, %83, %cst_35 {dimension_numbers = #tpu.dot_dimension_numbers<[2], [1], [1], [2], [0, 0, 0, 1, 1, 2], [0], [0]>} : vector<2x8x8xbf16>, vector<2x8x8xbf16>, vector<2x8x8xf32> -> vector<2x8x8xf32>
    "tpu.trace_stop"() : () -> ()
    %101 = vector.shape_cast %100 : vector<2x8x8xf32> to vector<16x8xf32>
    %102 = arith.truncf %101 : vector<16x8xf32> to vector<16x8xbf16>
    %c0_36 = arith.constant 0 : index
    %c2 = arith.constant 2 : index
    %c0_37 = arith.constant 0 : index
    %c0_38 = arith.constant 0 : index
    %103 = vector.load %arg5[%c0_36, %c2, %c0_37, %c0_38] : memref<1x4x8x32xbf16, #tpu.memory_space<vmem>>, vector<1x1x8x32xbf16>
    %104 = vector.shape_cast %103 : vector<1x1x8x32xbf16> to vector<8x32xbf16>
    %cst_39 = arith.constant dense<0.000000e+00> : vector<16x32xf32>
    %105 = tpu.matmul %102, %104, %cst_39 {dimension_numbers = #tpu.dot_dimension_numbers<[1], [0], [0], [1], [0, 0, 1, 1], [], []>} : vector<16x8xbf16>, vector<8x32xbf16>, vector<16x32xf32> -> vector<16x32xf32>
    %106 = arith.addf %77, %105 : vector<16x32xf32>
    %107 = vector.extract_strided_slice %14 {offsets = [0, 0, 24], sizes = [2, 8, 8], strides = [1, 1, 1]} : vector<2x8x32xf32> to vector<2x8x8xf32>
    %108 = arith.truncf %107 : vector<2x8x8xf32> to vector<2x8x8xbf16>
    %109 = vector.extract_strided_slice %16 {offsets = [0, 0, 24], sizes = [2, 8, 8], strides = [1, 1, 1]} : vector<2x8x32xf32> to vector<2x8x8xf32>
    %110 = arith.truncf %109 : vector<2x8x8xf32> to vector<2x8x8xbf16>
    %111 = vector.extract_strided_slice %18 {offsets = [0, 0, 24], sizes = [2, 8, 8], strides = [1, 1, 1]} : vector<2x8x32xf32> to vector<2x8x8xf32>
    %112 = arith.truncf %111 : vector<2x8x8xf32> to vector<2x8x8xbf16>
    "tpu.trace_start"() <{level = 10 : i32, message = "bqd,bkd->bqk"}> : () -> ()
    %cst_40 = arith.constant dense<0.000000e+00> : vector<2x8x8xf32>
    %113 = tpu.matmul %108, %110, %cst_40 {dimension_numbers = #tpu.dot_dimension_numbers<[2], [2], [1], [1], [0, 0, 0, 1, 1, 1], [0], [0]>} : vector<2x8x8xbf16>, vector<2x8x8xbf16>, vector<2x8x8xf32> -> vector<2x8x8xf32>
    "tpu.trace_stop"() : () -> ()
    %cst_41 = arith.constant 0.353553385 : f32
    %114 = vector.broadcast %cst_41 : f32 to vector<2x8x8xf32>
    %115 = arith.mulf %113, %114 : vector<2x8x8xf32>
    %116 = vector.broadcast %4 : vector<2x1x8xf32> to vector<2x8x8xf32>
    %117 = arith.addf %115, %116 : vector<2x8x8xf32>
    %cst_42 = arith.constant dense<0xFF800000> : vector<2x8xf32>
    %118 = vector.multi_reduction <maximumf>, %117, %cst_42 [2] : vector<2x8x8xf32> to vector<2x8xf32>
    %119 = vector.shape_cast %118 : vector<2x8xf32> to vector<2x8x1xf32>
    %120 = vector.broadcast %119 : vector<2x8x1xf32> to vector<2x8x8xf32>
    %121 = arith.subf %117, %120 : vector<2x8x8xf32>
    %122 = math.exp %121 : vector<2x8x8xf32>
    %cst_43 = arith.constant dense<0.000000e+00> : vector<2x8xf32>
    %123 = vector.multi_reduction <add>, %122, %cst_43 [2] : vector<2x8x8xf32> to vector<2x8xf32>
    %124 = vector.shape_cast %123 : vector<2x8xf32> to vector<2x8x1xf32>
    %125 = tpu.reciprocal %124 {approx = true} : vector<2x8x1xf32> -> vector<2x8x1xf32>
    %126 = vector.broadcast %125 : vector<2x8x1xf32> to vector<2x8x8xf32>
    %127 = arith.mulf %122, %126 : vector<2x8x8xf32>
    %128 = arith.truncf %127 : vector<2x8x8xf32> to vector<2x8x8xbf16>
    "tpu.trace_start"() <{level = 10 : i32, message = "bqk,bkd->bqd"}> : () -> ()
    %cst_44 = arith.constant dense<0.000000e+00> : vector<2x8x8xf32>
    %129 = tpu.matmul %128, %112, %cst_44 {dimension_numbers = #tpu.dot_dimension_numbers<[2], [1], [1], [2], [0, 0, 0, 1, 1, 2], [0], [0]>} : vector<2x8x8xbf16>, vector<2x8x8xbf16>, vector<2x8x8xf32> -> vector<2x8x8xf32>
    "tpu.trace_stop"() : () -> ()
    %130 = vector.shape_cast %129 : vector<2x8x8xf32> to vector<16x8xf32>
    %131 = arith.truncf %130 : vector<16x8xf32> to vector<16x8xbf16>
    %c0_45 = arith.constant 0 : index
    %c3 = arith.constant 3 : index
    %c0_46 = arith.constant 0 : index
    %c0_47 = arith.constant 0 : index
    %132 = vector.load %arg5[%c0_45, %c3, %c0_46, %c0_47] : memref<1x4x8x32xbf16, #tpu.memory_space<vmem>>, vector<1x1x8x32xbf16>
    %133 = vector.shape_cast %132 : vector<1x1x8x32xbf16> to vector<8x32xbf16>
    %cst_48 = arith.constant dense<0.000000e+00> : vector<16x32xf32>
    %134 = tpu.matmul %131, %133, %cst_48 {dimension_numbers = #tpu.dot_dimension_numbers<[1], [0], [0], [1], [0, 0, 1, 1], [], []>} : vector<16x8xbf16>, vector<8x32xbf16>, vector<16x32xf32> -> vector<16x32xf32>
    %135 = arith.addf %106, %134 : vector<16x32xf32>
    %c0_49 = arith.constant 0 : index
    %c0_50 = arith.constant 0 : index
    %c0_51 = arith.constant 0 : index
    %136 = vector.load %arg6[%c0_49, %c0_50, %c0_51] : memref<1x1x32xf32, #tpu.memory_space<vmem>>, vector<1x1x32xf32>
    %137 = vector.shape_cast %136 : vector<1x1x32xf32> to vector<1x32xf32>
    %138 = vector.broadcast %137 : vector<1x32xf32> to vector<16x32xf32>
    %139 = arith.addf %135, %138 : vector<16x32xf32>
    %140 = arith.addf %139, %3 : vector<16x32xf32>
    %c0_52 = arith.constant 0 : index
    %c0_53 = arith.constant 0 : index
    %c0_54 = arith.constant 0 : index
    %141 = vector.load %arg7[%c0_52, %c0_53, %c0_54] : memref<1x1x32xf32, #tpu.memory_space<vmem>>, vector<1x1x32xf32>
    %142 = vector.shape_cast %141 : vector<1x1x32xf32> to vector<1x32xf32>
    %c0_55 = arith.constant 0 : index
    %c0_56 = arith.constant 0 : index
    %c0_57 = arith.constant 0 : index
    %143 = vector.load %arg8[%c0_55, %c0_56, %c0_57] : memref<1x1x32xf32, #tpu.memory_space<vmem>>, vector<1x1x32xf32>
    %144 = vector.shape_cast %143 : vector<1x1x32xf32> to vector<1x32xf32>
    %cst_58 = arith.constant dense<0.000000e+00> : vector<16xf32>
    %145 = vector.multi_reduction <add>, %140, %cst_58 [1] : vector<16x32xf32> to vector<16xf32>
    %146 = vector.shape_cast %145 : vector<16xf32> to vector<16x1xf32>
    %cst_59 = arith.constant 3.200000e+01 : f32
    %147 = vector.broadcast %cst_59 : f32 to vector<16x1xf32>
    %148 = arith.divf %146, %147 : vector<16x1xf32>
    %149 = vector.broadcast %148 : vector<16x1xf32> to vector<16x32xf32>
    %150 = arith.subf %140, %149 : vector<16x32xf32>
    %151 = arith.mulf %150, %150 : vector<16x32xf32>
    %cst_60 = arith.constant dense<0.000000e+00> : vector<16xf32>
    %152 = vector.multi_reduction <add>, %151, %cst_60 [1] : vector<16x32xf32> to vector<16xf32>
    %153 = vector.shape_cast %152 : vector<16xf32> to vector<16x1xf32>
    %cst_61 = arith.constant 3.200000e+01 : f32
    %154 = vector.broadcast %cst_61 : f32 to vector<16x1xf32>
    %155 = arith.divf %153, %154 : vector<16x1xf32>
    %156 = vector.broadcast %148 : vector<16x1xf32> to vector<16x32xf32>
    %157 = arith.subf %140, %156 : vector<16x32xf32>
    %cst_62 = arith.constant 9.99999996E-13 : f32
    %158 = vector.broadcast %cst_62 : f32 to vector<16x1xf32>
    %159 = arith.addf %155, %158 : vector<16x1xf32>
    %160 = math.rsqrt %159 : vector<16x1xf32>
    %161 = vector.broadcast %160 : vector<16x1xf32> to vector<16x32xf32>
    %162 = arith.mulf %157, %161 : vector<16x32xf32>
    %163 = vector.broadcast %142 : vector<1x32xf32> to vector<16x32xf32>
    %164 = arith.mulf %162, %163 : vector<16x32xf32>
    %165 = vector.broadcast %144 : vector<1x32xf32> to vector<16x32xf32>
    %166 = arith.addf %164, %165 : vector<16x32xf32>
    %167 = arith.truncf %166 : vector<16x32xf32> to vector<16x32xbf16>
    %c0_63 = arith.constant 0 : index
    %c0_64 = arith.constant 0 : index
    %c0_65 = arith.constant 0 : index
    %168 = vector.load %arg9[%c0_63, %c0_64, %c0_65] : memref<1x32x64xbf16, #tpu.memory_space<vmem>>, vector<1x32x64xbf16>
    %169 = vector.shape_cast %168 : vector<1x32x64xbf16> to vector<32x64xbf16>
    %cst_66 = arith.constant dense<0.000000e+00> : vector<16x64xf32>
    %170 = tpu.matmul %167, %169, %cst_66 {dimension_numbers = #tpu.dot_dimension_numbers<[1], [0], [0], [1], [0, 0, 1, 1], [], []>} : vector<16x32xbf16>, vector<32x64xbf16>, vector<16x64xf32> -> vector<16x64xf32>
    %c0_67 = arith.constant 0 : index
    %c0_68 = arith.constant 0 : index
    %c0_69 = arith.constant 0 : index
    %171 = vector.load %arg10[%c0_67, %c0_68, %c0_69] : memref<1x1x64xf32, #tpu.memory_space<vmem>>, vector<1x1x64xf32>
    %172 = vector.shape_cast %171 : vector<1x1x64xf32> to vector<1x64xf32>
    %173 = vector.broadcast %172 : vector<1x64xf32> to vector<16x64xf32>
    %174 = arith.addf %170, %173 : vector<16x64xf32>
    %cst_70 = arith.constant 5.000000e-01 : f32
    %175 = vector.broadcast %cst_70 : f32 to vector<16x64xf32>
    %176 = arith.mulf %174, %175 : vector<16x64xf32>
    %cst_71 = arith.constant 0.707106769 : f32
    %177 = vector.broadcast %cst_71 : f32 to vector<16x64xf32>
    %178 = arith.mulf %174, %177 : vector<16x64xf32>
    %179 = math.erf %178 : vector<16x64xf32>
    %cst_72 = arith.constant 1.000000e+00 : f32
    %180 = vector.broadcast %cst_72 : f32 to vector<16x64xf32>
    %181 = arith.addf %180, %179 : vector<16x64xf32>
    %182 = arith.mulf %176, %181 : vector<16x64xf32>
    %183 = arith.truncf %182 : vector<16x64xf32> to vector<16x64xbf16>
    %c0_73 = arith.constant 0 : index
    %c0_74 = arith.constant 0 : index
    %c0_75 = arith.constant 0 : index
    %184 = vector.load %arg11[%c0_73, %c0_74, %c0_75] : memref<1x64x32xbf16, #tpu.memory_space<vmem>>, vector<1x64x32xbf16>
    %185 = vector.shape_cast %184 : vector<1x64x32xbf16> to vector<64x32xbf16>
    %cst_76 = arith.constant dense<0.000000e+00> : vector<16x32xf32>
    %186 = tpu.matmul %183, %185, %cst_76 {dimension_numbers = #tpu.dot_dimension_numbers<[1], [0], [0], [1], [0, 0, 1, 1], [], []>} : vector<16x64xbf16>, vector<64x32xbf16>, vector<16x32xf32> -> vector<16x32xf32>
    %c0_77 = arith.constant 0 : index
    %c0_78 = arith.constant 0 : index
    %c0_79 = arith.constant 0 : index
    %187 = vector.load %arg12[%c0_77, %c0_78, %c0_79] : memref<1x1x32xf32, #tpu.memory_space<vmem>>, vector<1x1x32xf32>
    %188 = vector.shape_cast %187 : vector<1x1x32xf32> to vector<1x32xf32>
    %189 = vector.broadcast %188 : vector<1x32xf32> to vector<16x32xf32>
    %190 = arith.addf %186, %189 : vector<16x32xf32>
    %191 = arith.addf %190, %166 : vector<16x32xf32>
    %c0_80 = arith.constant 0 : index
    %c0_81 = arith.constant 0 : index
    %c0_82 = arith.constant 0 : index
    %192 = vector.load %arg13[%c0_80, %c0_81, %c0_82] : memref<1x1x32xf32, #tpu.memory_space<vmem>>, vector<1x1x32xf32>
    %193 = vector.shape_cast %192 : vector<1x1x32xf32> to vector<1x32xf32>
    %c0_83 = arith.constant 0 : index
    %c0_84 = arith.constant 0 : index
    %c0_85 = arith.constant 0 : index
    %194 = vector.load %arg14[%c0_83, %c0_84, %c0_85] : memref<1x1x32xf32, #tpu.memory_space<vmem>>, vector<1x1x32xf32>
    %195 = vector.shape_cast %194 : vector<1x1x32xf32> to vector<1x32xf32>
    %cst_86 = arith.constant dense<0.000000e+00> : vector<16xf32>
    %196 = vector.multi_reduction <add>, %191, %cst_86 [1] : vector<16x32xf32> to vector<16xf32>
    %197 = vector.shape_cast %196 : vector<16xf32> to vector<16x1xf32>
    %cst_87 = arith.constant 3.200000e+01 : f32
    %198 = vector.broadcast %cst_87 : f32 to vector<16x1xf32>
    %199 = arith.divf %197, %198 : vector<16x1xf32>
    %200 = vector.broadcast %199 : vector<16x1xf32> to vector<16x32xf32>
    %201 = arith.subf %191, %200 : vector<16x32xf32>
    %202 = arith.mulf %201, %201 : vector<16x32xf32>
    %cst_88 = arith.constant dense<0.000000e+00> : vector<16xf32>
    %203 = vector.multi_reduction <add>, %202, %cst_88 [1] : vector<16x32xf32> to vector<16xf32>
    %204 = vector.shape_cast %203 : vector<16xf32> to vector<16x1xf32>
    %cst_89 = arith.constant 3.200000e+01 : f32
    %205 = vector.broadcast %cst_89 : f32 to vector<16x1xf32>
    %206 = arith.divf %204, %205 : vector<16x1xf32>
    %207 = vector.broadcast %199 : vector<16x1xf32> to vector<16x32xf32>
    %208 = arith.subf %191, %207 : vector<16x32xf32>
    %cst_90 = arith.constant 9.99999996E-13 : f32
    %209 = vector.broadcast %cst_90 : f32 to vector<16x1xf32>
    %210 = arith.addf %206, %209 : vector<16x1xf32>
    %211 = math.rsqrt %210 : vector<16x1xf32>
    %212 = vector.broadcast %211 : vector<16x1xf32> to vector<16x32xf32>
    %213 = arith.mulf %208, %212 : vector<16x32xf32>
    %214 = vector.broadcast %193 : vector<1x32xf32> to vector<16x32xf32>
    %215 = arith.mulf %213, %214 : vector<16x32xf32>
    %216 = vector.broadcast %195 : vector<1x32xf32> to vector<16x32xf32>
    %217 = arith.addf %215, %216 : vector<16x32xf32>
    %c0_91 = arith.constant 0 : index
    %c0_92 = arith.constant 0 : index
    %218 = vector.load %arg16[%c0_91, %c0_92] : memref<16x32xf32, #tpu.memory_space<vmem>>, vector<16x32xf32>
    tpu.vector_store %arg16[%c0_91, %c0_92], %217 {strides = array<i32>} : memref<16x32xf32, #tpu.memory_space<vmem>>, vector<16x32xf32>,
    %219 = vector.shape_cast %217 : vector<16x32xf32> to vector<2x8x32xf32>
    %c0_93 = arith.constant 0 : index
    %c0_94 = arith.constant 0 : index
    %c0_95 = arith.constant 0 : index
    %c0_96 = arith.constant 0 : index
    %220 = vector.load %arg15[%c0_93, %c0_94, %c0_95, %c0_96] : memref<1x2x8x32xf32, #tpu.memory_space<vmem>>, vector<1x2x8x32xf32>
    %221 = vector.shape_cast %220 : vector<1x2x8x32xf32> to vector<2x8x32xf32>
    %222 = vector.shape_cast %219 : vector<2x8x32xf32> to vector<1x2x8x32xf32>
    tpu.vector_store %arg15[%c0_93, %c0_94, %c0_95, %c0_96], %222 {strides = array<i32>} : memref<1x2x8x32xf32, #tpu.memory_space<vmem>>, vector<1x2x8x32xf32>,
    return
  }
  func.func @transform_0(%arg0: i32) -> (i32, i32, i32) {
    %c0_i32 = arith.constant 0 : i32
    %c0_i32_0 = arith.constant 0 : i32
    %c0_i32_1 = arith.constant 0 : i32
    %c0_i32_2 = arith.constant 0 : i32
    return %c0_i32, %c0_i32_0, %c0_i32_1 : i32, i32, i32
  }
  func.func @transform_1(%arg0: i32) -> (i32, i32, i32) {
    %c0_i32 = arith.constant 0 : i32
    %c0_i32_0 = arith.constant 0 : i32
    %c0_i32_1 = arith.constant 0 : i32
    %c0_i32_2 = arith.constant 0 : i32
    return %c0_i32, %c0_i32_0, %c0_i32_1 : i32, i32, i32
  }
  func.func @transform_2(%arg0: i32) -> (i32, i32, i32) {
    %c0_i32 = arith.constant 0 : i32
    %c0_i32_0 = arith.constant 0 : i32
    %c0_i32_1 = arith.constant 0 : i32
    return %arg0, %c0_i32, %c0_i32_0 : i32, i32, i32
  }
  func.func @transform_3(%arg0: i32) -> (i32, i32, i32) {
    %c0_i32 = arith.constant 0 : i32
    %c0_i32_0 = arith.constant 0 : i32
    %c0_i32_1 = arith.constant 0 : i32
    return %arg0, %c0_i32, %c0_i32_0 : i32, i32, i32
  }
  func.func @transform_4(%arg0: i32) -> (i32, i32, i32, i32) {
    %c0_i32 = arith.constant 0 : i32
    %c0_i32_0 = arith.constant 0 : i32
    %c0_i32_1 = arith.constant 0 : i32
    %c0_i32_2 = arith.constant 0 : i32
    return %arg0, %c0_i32, %c0_i32_0, %c0_i32_1 : i32, i32, i32, i32
  }
  func.func @transform_5(%arg0: i32) -> (i32, i32, i32) {
    %c0_i32 = arith.constant 0 : i32
    %c0_i32_0 = arith.constant 0 : i32
    %c0_i32_1 = arith.constant 0 : i32
    return %arg0, %c0_i32, %c0_i32_0 : i32, i32, i32
  }
  func.func @transform_6(%arg0: i32) -> (i32, i32, i32) {
    %c0_i32 = arith.constant 0 : i32
    %c0_i32_0 = arith.constant 0 : i32
    %c0_i32_1 = arith.constant 0 : i32
    return %arg0, %c0_i32, %c0_i32_0 : i32, i32, i32
  }
  func.func @transform_7(%arg0: i32) -> (i32, i32, i32) {
    %c0_i32 = arith.constant 0 : i32
    %c0_i32_0 = arith.constant 0 : i32
    %c0_i32_1 = arith.constant 0 : i32
    return %arg0, %c0_i32, %c0_i32_0 : i32, i32, i32
  }
  func.func @transform_8(%arg0: i32) -> (i32, i32, i32) {
    %c0_i32 = arith.constant 0 : i32
    %c0_i32_0 = arith.constant 0 : i32
    %c0_i32_1 = arith.constant 0 : i32
    return %arg0, %c0_i32, %c0_i32_0 : i32, i32, i32
  }
  func.func @transform_9(%arg0: i32) -> (i32, i32, i32) {
    %c0_i32 = arith.constant 0 : i32
    %c0_i32_0 = arith.constant 0 : i32
    %c0_i32_1 = arith.constant 0 : i32
    return %arg0, %c0_i32, %c0_i32_0 : i32, i32, i32
  }
  func.func @transform_10(%arg0: i32) -> (i32, i32, i32) {
    %c0_i32 = arith.constant 0 : i32
    %c0_i32_0 = arith.constant 0 : i32
    %c0_i32_1 = arith.constant 0 : i32
    return %arg0, %c0_i32, %c0_i32_0 : i32, i32, i32
  }
  func.func @transform_11(%arg0: i32) -> (i32, i32, i32) {
    %c0_i32 = arith.constant 0 : i32
    %c0_i32_0 = arith.constant 0 : i32
    %c0_i32_1 = arith.constant 0 : i32
    return %arg0, %c0_i32, %c0_i32_0 : i32, i32, i32
  }
  func.func @transform_12(%arg0: i32) -> (i32, i32, i32) {
    %c0_i32 = arith.constant 0 : i32
    %c0_i32_0 = arith.constant 0 : i32
    %c0_i32_1 = arith.constant 0 : i32
    return %arg0, %c0_i32, %c0_i32_0 : i32, i32, i32
  }
  func.func @transform_13(%arg0: i32) -> (i32, i32, i32) {
    %c0_i32 = arith.constant 0 : i32
    %c0_i32_0 = arith.constant 0 : i32
    %c0_i32_1 = arith.constant 0 : i32
    return %arg0, %c0_i32, %c0_i32_0 : i32, i32, i32
  }
  func.func @transform_14(%arg0: i32) -> (i32, i32, i32, i32) {
    %c0_i32 = arith.constant 0 : i32
    %c0_i32_0 = arith.constant 0 : i32
    %c0_i32_1 = arith.constant 0 : i32
    %c0_i32_2 = arith.constant 0 : i32
    return %arg0, %c0_i32, %c0_i32_0, %c0_i32_1 : i32, i32, i32, i32
  }
}

</mosaic_0001>

<llo_original>
// kernel: tpu_custom_call.1
$region0: #{tpu_custom_call.1}
  #allocation0 [shape = 'u32[]', space=smem, size = 0x4, offset = 0x4, fixed_abs, tag = 'smem constant byte address 0x4 - core index']
  #allocation1 [shape = 'u32[144,128]{1,0:T(1,128)}', space=vmem, size = 0x12000, scoped, tag = 'internal scratch']
  #allocation2 [shape = 'f32[16,32]{1,0:T(8,128)}', space=vmem, size = 0x2000, scoped, tag = 'scratch operand']
  %s0 = inlined_call_operand.hbm [shape: f32[2,8,32], index: 0, kind: input, shape index: {}]
  %s1 = inlined_call_operand.hbm [shape: f32[2,1,8], index: 1, kind: input, shape index: {}]
  %s2 = inlined_call_operand.vmem [shape: bf16[2,32,96], index: 2, kind: input, shape index: {}]
  %s3 = inlined_call_operand.vmem [shape: f32[2,1,96], index: 3, kind: input, shape index: {}]
  %s4 = inlined_call_operand.vmem [shape: bf16[2,4,8,32], index: 4, kind: input, shape index: {}]
  %s5 = inlined_call_operand.vmem [shape: f32[2,1,32], index: 5, kind: input, shape index: {}]
  %s6 = inlined_call_operand.vmem [shape: f32[2,1,32], index: 6, kind: input, shape index: {}]
  %s7 = inlined_call_operand.vmem [shape: f32[2,1,32], index: 7, kind: input, shape index: {}]
  %s8 = inlined_call_operand.vmem [shape: bf16[2,32,64], index: 8, kind: input, shape index: {}]
  %s9 = inlined_call_operand.vmem [shape: f32[2,1,64], index: 9, kind: input, shape index: {}]
  %s10 = inlined_call_operand.vmem [shape: bf16[2,64,32], index: 10, kind: input, shape index: {}]
  %s11 = inlined_call_operand.vmem [shape: f32[2,1,32], index: 11, kind: input, shape index: {}]
  %s12 = inlined_call_operand.vmem [shape: f32[2,1,32], index: 12, kind: input, shape index: {}]
  %s13 = inlined_call_operand.vmem [shape: f32[2,1,32], index: 13, kind: input, shape index: {}]
  %s14 = inlined_call_operand.hbm [shape: f32[2,2,8,32], index: 14, kind: output, shape index: {}]
  %s15 = sld [smem:[#allocation0]]
  $region101: #{tpu_custom_call.1} parent=0
    _
  %s17 = ssub.s32 1, %s15
  %s18 = scalar_select 0, %s17, %s15
  $region1: #{tpu_custom_call.1} parent=0
    #allocation3 [shape = 'u8[8192]{0}', space=vmem, size = 0x2000, scoped, tag = 'input window, operand 0, single buffered']
    #allocation4 [shape = 's32[2]{0}', space=sflag, size = 0x8, scoped, tag = 'scoped memory for tpu_custom_call.1']
    #allocation5 [shape = 's32[2]{0}', space=sflag, size = 0x8, scoped, tag = 'scoped memory for tpu_custom_call.1']
    #allocation6 [shape = 'u8[1024]{0}', space=vmem, size = 0x400, scoped, tag = 'input window, operand 1, single buffered']
    #allocation7 [shape = 's32[1]{0}', space=sflag, size = 0x4, scoped, tag = 'scoped memory for tpu_custom_call.1']
    #allocation8 [shape = 'u8[16384]{0}', space=vmem, size = 0x4000, scoped, tag = 'output window, operand 0']
    %19 = vsyncpa [#allocation4], 0
    %20 = vsyncpa [#allocation7], 0
    %21 = vsyncpa [#allocation5], 0
    %s22 = scalar_lea.sflag [#allocation5], 1
    %23 = vsyncpa %s22, 0
    loop: start=0, step=1, limit=4
    $region2: #{tpu_custom_call.1} parent=1 // loop_pre_header
      _
    $region3: #{tpu_custom_call.1} parent=1 // loop_header
      %s25 = sphi 0, %s29
      %p26 = scmp.ge.s32.totalorder %s25, 4
      %s33 = sphi 0, %s33
      %s35 = sphi 0, %s33
      %s36 = sphi 0, %s35
      %s50 = sphi 0, %s36
      %s54 = sphi 0, %s54
      %s56 = sphi 0, %s54
      %s57 = sphi 0, %s56
      %s71 = sphi 0, %s57
      %s77 = sphi 0, %s79
      %s80 = sphi 0, %s77
      %s81 = sphi 0, %s80
      %s97 = sphi 0, %s81
      %s103 = sphi 0, %s105
      %s106 = sphi 0, %s103
      %s107 = sphi 0, %s106
      %s123 = sphi 0, %s107
      %s129 = sphi 0, %s131
      %s132 = sphi 0, %s129
      %s133 = sphi 0, %s132
      %s149 = sphi 0, %s133
      %s155 = sphi 0, %s157
      %s158 = sphi 0, %s155
      %s159 = sphi 0, %s158
      %s175 = sphi 0, %s159
      %s181 = sphi 0, %s183
      %s184 = sphi 0, %s181
      %s185 = sphi 0, %s184
      %s201 = sphi 0, %s185
      %s207 = sphi 0, %s209
      %s210 = sphi 0, %s207
      %s211 = sphi 0, %s210
      %s227 = sphi 0, %s211
      %s233 = sphi 0, %s235
      %s236 = sphi 0, %s233
      %s237 = sphi 0, %s236
      %s253 = sphi 0, %s237
      %s259 = sphi 0, %s261
      %s262 = sphi 0, %s259
      %s263 = sphi 0, %s262
      %s279 = sphi 0, %s263
      %s285 = sphi 0, %s287
      %s288 = sphi 0, %s285
      %s289 = sphi 0, %s288
      %s305 = sphi 0, %s289
      %s311 = sphi 0, %s313
      %s314 = sphi 0, %s311
      %s315 = sphi 0, %s314
      %s331 = sphi 0, %s315
      %s337 = sphi 0, %s339
      %s340 = sphi 0, %s337
      %s341 = sphi 0, %s340
      %s357 = sphi 0, %s341
      %s363 = sphi 0, %s365
      %s366 = sphi 0, %s363
      %s367 = sphi 0, %s366
      %s383 = sphi 0, %s367
      %s389 = sphi 0, %s391
      %s392 = sphi 0, %s389
      %s393 = sphi 0, %s392
      %s409 = sphi 0, %s393
    $region4: #{tpu_custom_call.1} parent=1 // loop_header_branch
      %28 = sbr.rel (%p26) target = $region8
    $region5: #{tpu_custom_call.1} parent=1 // loop_body
      %s30 = ssub.s32 %s25, 1
      %s31 = ssub.s32 %s25, 2
      %s32 = sadd.s32 %s25, 1
      %s34 = sadd.s32 %s33, 1
      %p37 = scmp.eq.s32.totalorder %s25, 1
      %p38 = scmp.ne.s32.totalorder %s33, %s35
      %p39 = scmp.eq.s32.totalorder %s25, 0
      %p40 = por %p38, %p39
      %p41 = scmp.ne.s32.totalorder %s33, %s35
      %p42 = scmp.eq.s32.totalorder %s30, 1
      %p43 = por %p41, %p42
      %p44 = scmp.ne.s32.totalorder %s35, %s36
      %p45 = scmp.eq.s32.totalorder %s30, 0
      %p46 = por %p44, %p45
      %p47 = scmp.ne.s32.totalorder %s35, %s36
      %p48 = scmp.eq.s32.totalorder %s31, 1
      %p49 = por %p47, %p48
      %p51 = scmp.ne.s32.totalorder %s36, %s50
      %p52 = scmp.eq.s32.totalorder %s31, 0
      %p53 = por %p51, %p52
      %s55 = sadd.s32 %s54, 1
      %p58 = scmp.eq.s32.totalorder %s25, 1
      %p59 = scmp.ne.s32.totalorder %s54, %s56
      %p60 = scmp.eq.s32.totalorder %s25, 0
      %p61 = por %p59, %p60
      %p62 = scmp.ne.s32.totalorder %s54, %s56
      %p63 = scmp.eq.s32.totalorder %s30, 1
      %p64 = por %p62, %p63
      %p65 = scmp.ne.s32.totalorder %s56, %s57
      %p66 = scmp.eq.s32.totalorder %s30, 0
      %p67 = por %p65, %p66
      %p68 = scmp.ne.s32.totalorder %s56, %s57
      %p69 = scmp.eq.s32.totalorder %s31, 1
      %p70 = por %p68, %p69
      %p72 = scmp.ne.s32.totalorder %s57, %s71
      %p73 = scmp.eq.s32.totalorder %s31, 0
      %p74 = por %p72, %p73
      %s75 = ssub.s32 %s25, %s32
      %p76 = scmp.eq.s32.totalorder %s75, 0
      %s78 = sadd.s32 %s77, 1
      %s79 = scalar_select %p76, %s77, %s78
      %p82 = pneg %p76
      %p83 = scmp.eq.s32.totalorder %s25, 1
      %p84 = por %p82, %p83
      %p85 = scmp.ne.s32.totalorder %s77, %s80
      %p86 = scmp.eq.s32.totalorder %s25, 0
      %p87 = por %p85, %p86
      %p88 = scmp.ne.s32.totalorder %s77, %s80
      %p89 = scmp.eq.s32.totalorder %s30, 1
      %p90 = por %p88, %p89
      %p91 = scmp.ne.s32.totalorder %s80, %s81
      %p92 = scmp.eq.s32.totalorder %s30, 0
      %p93 = por %p91, %p92
      %p94 = scmp.ne.s32.totalorder %s80, %s81
      %p95 = scmp.eq.s32.totalorder %s31, 1
      %p96 = por %p94, %p95
      %p98 = scmp.ne.s32.totalorder %s81, %s97
      %p99 = scmp.eq.s32.totalorder %s31, 0
      %p100 = por %p98, %p99
      %s101 = ssub.s32 %s25, %s32
      %p102 = scmp.eq.s32.totalorder %s101, 0
      %s104 = sadd.s32 %s103, 1
      %s105 = scalar_select %p102, %s103, %s104
      %p108 = pneg %p102
      %p109 = scmp.eq.s32.totalorder %s25, 1
      %p110 = por %p108, %p109
      %p111 = scmp.ne.s32.totalorder %s103, %s106
      %p112 = scmp.eq.s32.totalorder %s25, 0
      %p113 = por %p111, %p112
      %p114 = scmp.ne.s32.totalorder %s103, %s106
      %p115 = scmp.eq.s32.totalorder %s30, 1
      %p116 = por %p114, %p115
      %p117 = scmp.ne.s32.totalorder %s106, %s107
      %p118 = scmp.eq.s32.totalorder %s30, 0
      %p119 = por %p117, %p118
      %p120 = scmp.ne.s32.totalorder %s106, %s107
      %p121 = scmp.eq.s32.totalorder %s31, 1
      %p122 = por %p120, %p121
      %p124 = scmp.ne.s32.totalorder %s107, %s123
      %p125 = scmp.eq.s32.totalorder %s31, 0
      %p126 = por %p124, %p125
      %s127 = ssub.s32 %s25, %s32
      %p128 = scmp.eq.s32.totalorder %s127, 0
      %s130 = sadd.s32 %s129, 1
      %s131 = scalar_select %p128, %s129, %s130
      %p134 = pneg %p128
      %p135 = scmp.eq.s32.totalorder %s25, 1
      %p136 = por %p134, %p135
      %p137 = scmp.ne.s32.totalorder %s129, %s132
      %p138 = scmp.eq.s32.totalorder %s25, 0
      %p139 = por %p137, %p138
      %p140 = scmp.ne.s32.totalorder %s129, %s132
      %p141 = scmp.eq.s32.totalorder %s30, 1
      %p142 = por %p140, %p141
      %p143 = scmp.ne.s32.totalorder %s132, %s133
      %p144 = scmp.eq.s32.totalorder %s30, 0
      %p145 = por %p143, %p144
      %p146 = scmp.ne.s32.totalorder %s132, %s133
      %p147 = scmp.eq.s32.totalorder %s31, 1
      %p148 = por %p146, %p147
      %p150 = scmp.ne.s32.totalorder %s133, %s149
      %p151 = scmp.eq.s32.totalorder %s31, 0
      %p152 = por %p150, %p151
      %s153 = ssub.s32 %s25, %s32
      %p154 = scmp.eq.s32.totalorder %s153, 0
      %s156 = sadd.s32 %s155, 1
      %s157 = scalar_select %p154, %s155, %s156
      %p160 = pneg %p154
      %p161 = scmp.eq.s32.totalorder %s25, 1
      %p162 = por %p160, %p161
      %p163 = scmp.ne.s32.totalorder %s155, %s158
      %p164 = scmp.eq.s32.totalorder %s25, 0
      %p165 = por %p163, %p164
      %p166 = scmp.ne.s32.totalorder %s155, %s158
      %p167 = scmp.eq.s32.totalorder %s30, 1
      %p168 = por %p166, %p167
      %p169 = scmp.ne.s32.totalorder %s158, %s159
      %p170 = scmp.eq.s32.totalorder %s30, 0
      %p171 = por %p169, %p170
      %p172 = scmp.ne.s32.totalorder %s158, %s159
      %p173 = scmp.eq.s32.totalorder %s31, 1
      %p174 = por %p172, %p173
      %p176 = scmp.ne.s32.totalorder %s159, %s175
      %p177 = scmp.eq.s32.totalorder %s31, 0
      %p178 = por %p176, %p177
      %s179 = ssub.s32 %s25, %s32
      %p180 = scmp.eq.s32.totalorder %s179, 0
      %s182 = sadd.s32 %s181, 1
      %s183 = scalar_select %p180, %s181, %s182
      %p186 = pneg %p180
      %p187 = scmp.eq.s32.totalorder %s25, 1
      %p188 = por %p186, %p187
      %p189 = scmp.ne.s32.totalorder %s181, %s184
      %p190 = scmp.eq.s32.totalorder %s25, 0
      %p191 = por %p189, %p190
      %p192 = scmp.ne.s32.totalorder %s181, %s184
      %p193 = scmp.eq.s32.totalorder %s30, 1
      %p194 = por %p192, %p193
      %p195 = scmp.ne.s32.totalorder %s184, %s185
      %p196 = scmp.eq.s32.totalorder %s30, 0
      %p197 = por %p195, %p196
      %p198 = scmp.ne.s32.totalorder %s184, %s185
      %p199 = scmp.eq.s32.totalorder %s31, 1
      %p200 = por %p198, %p199
      %p202 = scmp.ne.s32.totalorder %s185, %s201
      %p203 = scmp.eq.s32.totalorder %s31, 0
      %p204 = por %p202, %p203
      %s205 = ssub.s32 %s25, %s32
      %p206 = scmp.eq.s32.totalorder %s205, 0
      %s208 = sadd.s32 %s207, 1
      %s209 = scalar_select %p206, %s207, %s208
      %p212 = pneg %p206
      %p213 = scmp.eq.s32.totalorder %s25, 1
      %p214 = por %p212, %p213
      %p215 = scmp.ne.s32.totalorder %s207, %s210
      %p216 = scmp.eq.s32.totalorder %s25, 0
      %p217 = por %p215, %p216
      %p218 = scmp.ne.s32.totalorder %s207, %s210
      %p219 = scmp.eq.s32.totalorder %s30, 1
      %p220 = por %p218, %p219
      %p221 = scmp.ne.s32.totalorder %s210, %s211
      %p222 = scmp.eq.s32.totalorder %s30, 0
      %p223 = por %p221, %p222
      %p224 = scmp.ne.s32.totalorder %s210, %s211
      %p225 = scmp.eq.s32.totalorder %s31, 1
      %p226 = por %p224, %p225
      %p228 = scmp.ne.s32.totalorder %s211, %s227
      %p229 = scmp.eq.s32.totalorder %s31, 0
      %p230 = por %p228, %p229
      %s231 = ssub.s32 %s25, %s32
      %p232 = scmp.eq.s32.totalorder %s231, 0
      %s234 = sadd.s32 %s233, 1
      %s235 = scalar_select %p232, %s233, %s234
      %p238 = pneg %p232
      %p239 = scmp.eq.s32.totalorder %s25, 1
      %p240 = por %p238, %p239
      %p241 = scmp.ne.s32.totalorder %s233, %s236
      %p242 = scmp.eq.s32.totalorder %s25, 0
      %p243 = por %p241, %p242
      %p244 = scmp.ne.s32.totalorder %s233, %s236
      %p245 = scmp.eq.s32.totalorder %s30, 1
      %p246 = por %p244, %p245
      %p247 = scmp.ne.s32.totalorder %s236, %s237
      %p248 = scmp.eq.s32.totalorder %s30, 0
      %p249 = por %p247, %p248
      %p250 = scmp.ne.s32.totalorder %s236, %s237
      %p251 = scmp.eq.s32.totalorder %s31, 1
      %p252 = por %p250, %p251
      %p254 = scmp.ne.s32.totalorder %s237, %s253
      %p255 = scmp.eq.s32.totalorder %s31, 0
      %p256 = por %p254, %p255
      %s257 = ssub.s32 %s25, %s32
      %p258 = scmp.eq.s32.totalorder %s257, 0
      %s260 = sadd.s32 %s259, 1
      %s261 = scalar_select %p258, %s259, %s260
      %p264 = pneg %p258
      %p265 = scmp.eq.s32.totalorder %s25, 1
      %p266 = por %p264, %p265
      %p267 = scmp.ne.s32.totalorder %s259, %s262
      %p268 = scmp.eq.s32.totalorder %s25, 0
      %p269 = por %p267, %p268
      %p270 = scmp.ne.s32.totalorder %s259, %s262
      %p271 = scmp.eq.s32.totalorder %s30, 1
      %p272 = por %p270, %p271
      %p273 = scmp.ne.s32.totalorder %s262, %s263
      %p274 = scmp.eq.s32.totalorder %s30, 0
      %p275 = por %p273, %p274
      %p276 = scmp.ne.s32.totalorder %s262, %s263
      %p277 = scmp.eq.s32.totalorder %s31, 1
      %p278 = por %p276, %p277
      %p280 = scmp.ne.s32.totalorder %s263, %s279
      %p281 = scmp.eq.s32.totalorder %s31, 0
      %p282 = por %p280, %p281
      %s283 = ssub.s32 %s25, %s32
      %p284 = scmp.eq.s32.totalorder %s283, 0
      %s286 = sadd.s32 %s285, 1
      %s287 = scalar_select %p284, %s285, %s286
      %p290 = pneg %p284
      %p291 = scmp.eq.s32.totalorder %s25, 1
      %p292 = por %p290, %p291
      %p293 = scmp.ne.s32.totalorder %s285, %s288
      %p294 = scmp.eq.s32.totalorder %s25, 0
      %p295 = por %p293, %p294
      %p296 = scmp.ne.s32.totalorder %s285, %s288
      %p297 = scmp.eq.s32.totalorder %s30, 1
      %p298 = por %p296, %p297
      %p299 = scmp.ne.s32.totalorder %s288, %s289
      %p300 = scmp.eq.s32.totalorder %s30, 0
      %p301 = por %p299, %p300
      %p302 = scmp.ne.s32.totalorder %s288, %s289
      %p303 = scmp.eq.s32.totalorder %s31, 1
      %p304 = por %p302, %p303
      %p306 = scmp.ne.s32.totalorder %s289, %s305
      %p307 = scmp.eq.s32.totalorder %s31, 0
      %p308 = por %p306, %p307
      %s309 = ssub.s32 %s25, %s32
      %p310 = scmp.eq.s32.totalorder %s309, 0
      %s312 = sadd.s32 %s311, 1
      %s313 = scalar_select %p310, %s311, %s312
      %p316 = pneg %p310
      %p317 = scmp.eq.s32.totalorder %s25, 1
      %p318 = por %p316, %p317
      %p319 = scmp.ne.s32.totalorder %s311, %s314
      %p320 = scmp.eq.s32.totalorder %s25, 0
      %p321 = por %p319, %p320
      %p322 = scmp.ne.s32.totalorder %s311, %s314
      %p323 = scmp.eq.s32.totalorder %s30, 1
      %p324 = por %p322, %p323
      %p325 = scmp.ne.s32.totalorder %s314, %s315
      %p326 = scmp.eq.s32.totalorder %s30, 0
      %p327 = por %p325, %p326
      %p328 = scmp.ne.s32.totalorder %s314, %s315
      %p329 = scmp.eq.s32.totalorder %s31, 1
      %p330 = por %p328, %p329
      %p332 = scmp.ne.s32.totalorder %s315, %s331
      %p333 = scmp.eq.s32.totalorder %s31, 0
      %p334 = por %p332, %p333
      %s335 = ssub.s32 %s25, %s32
      %p336 = scmp.eq.s32.totalorder %s335, 0
      %s338 = sadd.s32 %s337, 1
      %s339 = scalar_select %p336, %s337, %s338
      %p342 = pneg %p336
      %p343 = scmp.eq.s32.totalorder %s25, 1
      %p344 = por %p342, %p343
      %p345 = scmp.ne.s32.totalorder %s337, %s340
      %p346 = scmp.eq.s32.totalorder %s25, 0
      %p347 = por %p345, %p346
      %p348 = scmp.ne.s32.totalorder %s337, %s340
      %p349 = scmp.eq.s32.totalorder %s30, 1
      %p350 = por %p348, %p349
      %p351 = scmp.ne.s32.totalorder %s340, %s341
      %p352 = scmp.eq.s32.totalorder %s30, 0
      %p353 = por %p351, %p352
      %p354 = scmp.ne.s32.totalorder %s340, %s341
      %p355 = scmp.eq.s32.totalorder %s31, 1
      %p356 = por %p354, %p355
      %p358 = scmp.ne.s32.totalorder %s341, %s357
      %p359 = scmp.eq.s32.totalorder %s31, 0
      %p360 = por %p358, %p359
      %s361 = ssub.s32 %s25, %s32
      %p362 = scmp.eq.s32.totalorder %s361, 0
      %s364 = sadd.s32 %s363, 1
      %s365 = scalar_select %p362, %s363, %s364
      %p368 = pneg %p362
      %p369 = scmp.eq.s32.totalorder %s25, 1
      %p370 = por %p368, %p369
      %p371 = scmp.ne.s32.totalorder %s363, %s366
      %p372 = scmp.eq.s32.totalorder %s25, 0
      %p373 = por %p371, %p372
      %p374 = scmp.ne.s32.totalorder %s363, %s366
      %p375 = scmp.eq.s32.totalorder %s30, 1
      %p376 = por %p374, %p375
      %p377 = scmp.ne.s32.totalorder %s366, %s367
      %p378 = scmp.eq.s32.totalorder %s30, 0
      %p379 = por %p377, %p378
      %p380 = scmp.ne.s32.totalorder %s366, %s367
      %p381 = scmp.eq.s32.totalorder %s31, 1
      %p382 = por %p380, %p381
      %p384 = scmp.ne.s32.totalorder %s367, %s383
      %p385 = scmp.eq.s32.totalorder %s31, 0
      %p386 = por %p384, %p385
      %s387 = ssub.s32 %s25, %s32
      %p388 = scmp.eq.s32.totalorder %s387, 0
      %s390 = sadd.s32 %s389, 1
      %s391 = scalar_select %p388, %s389, %s390
      %p394 = pneg %p388
      %p395 = scmp.eq.s32.totalorder %s25, 1
      %p396 = por %p394, %p395
      %p397 = scmp.ne.s32.totalorder %s389, %s392
      %p398 = scmp.eq.s32.totalorder %s25, 0
      %p399 = por %p397, %p398
      %p400 = scmp.ne.s32.totalorder %s389, %s392
      %p401 = scmp.eq.s32.totalorder %s30, 1
      %p402 = por %p400, %p401
      %p403 = scmp.ne.s32.totalorder %s392, %s393
      %p404 = scmp.eq.s32.totalorder %s30, 0
      %p405 = por %p403, %p404
      %p406 = scmp.ne.s32.totalorder %s392, %s393
      %p407 = scmp.eq.s32.totalorder %s31, 1
      %p408 = por %p406, %p407
      %p410 = scmp.ne.s32.totalorder %s393, %s409
      %p411 = scmp.eq.s32.totalorder %s31, 0
      %p412 = por %p410, %p411
      %p413 = scmp.le.s32.totalorder 1, %s25
      %p414 = scmp.lt.s32.totalorder %s25, 3
      %p415 = pnand %p413, %p414
      %p416 = pneg %p415
      // Predicated region
      $region9: #{tpu_custom_call.1} parent=5 // pred_check
        _
      $region10: #{tpu_custom_call.1} parent=5 // pred_check_branch
        %418 = sbr.rel (%p415) target = $region12
      $region11: #{tpu_custom_call.1} parent=5 // pred_region
        %s419 = ssub.s32 %s25, 1
        // Predicated region
        $region13: #{tpu_custom_call.1} parent=11 // pred_check
          %p420 = pneg %p46
        $region14: #{tpu_custom_call.1} parent=11 // pred_check_branch
          %422 = sbr.rel (%p420) target = $region16
        $region15: #{tpu_custom_call.1} parent=11 // pred_region
          %s424 = ssub.s32 256, 256
          %425 = vsyncadd [#allocation4], %s424
          %s426 = sshll.u32 [#allocation3], 4
          %s427 = int_to_ptr.vmem [resolvable:$true] %s426
          %432 = dma.hbm_to_vmem [thread:$0]  %s0, 256, %s427, [#allocation4], 128, 128, 8
        $region16: #{tpu_custom_call.1} parent=11 // pred_fallthru
          _
        // Predicated region
        $region17: #{tpu_custom_call.1} parent=11 // pred_check
          %p433 = pneg %p67
        $region18: #{tpu_custom_call.1} parent=11 // pred_check_branch
          %435 = sbr.rel (%p433) target = $region20
        $region19: #{tpu_custom_call.1} parent=11 // pred_region
          %s437 = ssub.s32 32, 32
          %438 = vsyncadd [#allocation7], %s437
          %s439 = sshll.u32 [#allocation6], 4
          %s440 = int_to_ptr.vmem [resolvable:$true] %s439
          %445 = dma.hbm_to_vmem [thread:$0]  %s1, 32, %s440, [#allocation7], 16, 16, 1
        $region20: #{tpu_custom_call.1} parent=11 // pred_fallthru
          _
      $region12: #{tpu_custom_call.1} parent=5 // pred_fallthru
        _
      %p446 = scmp.lt.s32.totalorder %s25, 2
      // Predicated region
      $region21: #{tpu_custom_call.1} parent=5 // pred_check
        %p447 = pneg %p446
      $region22: #{tpu_custom_call.1} parent=5 // pred_check_branch
        %449 = sbr.rel (%p447) target = $region24
      $region23: #{tpu_custom_call.1} parent=5 // pred_region
        // Predicated region
        $region25: #{tpu_custom_call.1} parent=23 // pred_check
          %p450 = pneg %p87
        $region26: #{tpu_custom_call.1} parent=23 // pred_check_branch
          %452 = sbr.rel (%p450) target = $region28
        $region27: #{tpu_custom_call.1} parent=23 // pred_region
          %p453 = scmp.lt.s32.totalorder %s25, 1
          %s454 = scalar_select %p453, %s25, 1
          %s455 = smul.addr %s454, 4
          %s456 = smul.addr %s455, 4
          %s457 = scalar_lea.vmem %s2, %s456
        $region28: #{tpu_custom_call.1} parent=23 // pred_fallthru
          _
        // Predicated region
        $region29: #{tpu_custom_call.1} parent=23 // pred_check
          %p458 = pneg %p113
        $region30: #{tpu_custom_call.1} parent=23 // pred_check_branch
          %460 = sbr.rel (%p458) target = $region32
        $region31: #{tpu_custom_call.1} parent=23 // pred_region
          %p461 = scmp.lt.s32.totalorder %s25, 1
          %s462 = scalar_select %p461, %s25, 1
          %s463 = scalar_lea.vmem %s3, %s462
        $region32: #{tpu_custom_call.1} parent=23 // pred_fallthru
          _
        // Predicated region
        $region33: #{tpu_custom_call.1} parent=23 // pred_check
          %p464 = pneg %p139
        $region34: #{tpu_custom_call.1} parent=23 // pred_check_branch
          %466 = sbr.rel (%p464) target = $region36
        $region35: #{tpu_custom_call.1} parent=23 // pred_region
          %p467 = scmp.lt.s32.totalorder %s25, 1
          %s468 = scalar_select %p467, %s25, 1
          %s469 = smul.addr %s468, 4
          %s470 = smul.addr %s469, 4
          %s471 = scalar_lea.vmem %s4, %s470
        $region36: #{tpu_custom_call.1} parent=23 // pred_fallthru
          _
        // Predicated region
        $region37: #{tpu_custom_call.1} parent=23 // pred_check
          %p472 = pneg %p165
        $region38: #{tpu_custom_call.1} parent=23 // pred_check_branch
          %474 = sbr.rel (%p472) target = $region40
        $region39: #{tpu_custom_call.1} parent=23 // pred_region
          %p475 = scmp.lt.s32.totalorder %s25, 1
          %s476 = scalar_select %p475, %s25, 1
          %s477 = scalar_lea.vmem %s5, %s476
        $region40: #{tpu_custom_call.1} parent=23 // pred_fallthru
          _
        // Predicated region
        $region41: #{tpu_custom_call.1} parent=23 // pred_check
          %p478 = pneg %p191
        $region42: #{tpu_custom_call.1} parent=23 // pred_check_branch
          %480 = sbr.rel (%p478) target = $region44
        $region43: #{tpu_custom_call.1} parent=23 // pred_region
          %p481 = scmp.lt.s32.totalorder %s25, 1
          %s482 = scalar_select %p481, %s25, 1
          %s483 = scalar_lea.vmem %s6, %s482
        $region44: #{tpu_custom_call.1} parent=23 // pred_fallthru
          _
        // Predicated region
        $region45: #{tpu_custom_call.1} parent=23 // pred_check
          %p484 = pneg %p217
        $region46: #{tpu_custom_call.1} parent=23 // pred_check_branch
          %486 = sbr.rel (%p484) target = $region48
        $region47: #{tpu_custom_call.1} parent=23 // pred_region
          %p487 = scmp.lt.s32.totalorder %s25, 1
          %s488 = scalar_select %p487, %s25, 1
          %s489 = scalar_lea.vmem %s7, %s488
        $region48: #{tpu_custom_call.1} parent=23 // pred_fallthru
          _
        // Predicated region
        $region49: #{tpu_custom_call.1} parent=23 // pred_check
          %p490 = pneg %p243
        $region50: #{tpu_custom_call.1} parent=23 // pred_check_branch
          %492 = sbr.rel (%p490) target = $region52
        $region51: #{tpu_custom_call.1} parent=23 // pred_region
          %p493 = scmp.lt.s32.totalorder %s25, 1
          %s494 = scalar_select %p493, %s25, 1
          %s495 = smul.addr %s494, 4
          %s496 = smul.addr %s495, 4
          %s497 = scalar_lea.vmem %s8, %s496
        $region52: #{tpu_custom_call.1} parent=23 // pred_fallthru
          _
        // Predicated region
        $region53: #{tpu_custom_call.1} parent=23 // pred_check
          %p498 = pneg %p269
        $region54: #{tpu_custom_call.1} parent=23 // pred_check_branch
          %500 = sbr.rel (%p498) target = $region56
        $region55: #{tpu_custom_call.1} parent=23 // pred_region
          %p501 = scmp.lt.s32.totalorder %s25, 1
          %s502 = scalar_select %p501, %s25, 1
          %s503 = scalar_lea.vmem %s9, %s502
        $region56: #{tpu_custom_call.1} parent=23 // pred_fallthru
          _
        // Predicated region
        $region57: #{tpu_custom_call.1} parent=23 // pred_check
          %p504 = pneg %p295
        $region58: #{tpu_custom_call.1} parent=23 // pred_check_branch
          %506 = sbr.rel (%p504) target = $region60
        $region59: #{tpu_custom_call.1} parent=23 // pred_region
          %p507 = scmp.lt.s32.totalorder %s25, 1
          %s508 = scalar_select %p507, %s25, 1
          %s509 = smul.addr %s508, 8
          %s510 = smul.addr %s509, 4
          %s511 = scalar_lea.vmem %s10, %s510
        $region60: #{tpu_custom_call.1} parent=23 // pred_fallthru
          _
        // Predicated region
        $region61: #{tpu_custom_call.1} parent=23 // pred_check
          %p512 = pneg %p321
        $region62: #{tpu_custom_call.1} parent=23 // pred_check_branch
          %514 = sbr.rel (%p512) target = $region64
        $region63: #{tpu_custom_call.1} parent=23 // pred_region
          %p515 = scmp.lt.s32.totalorder %s25, 1
          %s516 = scalar_select %p515, %s25, 1
          %s517 = scalar_lea.vmem %s11, %s516
        $region64: #{tpu_custom_call.1} parent=23 // pred_fallthru
          _
        // Predicated region
        $region65: #{tpu_custom_call.1} parent=23 // pred_check
          %p518 = pneg %p347
        $region66: #{tpu_custom_call.1} parent=23 // pred_check_branch
          %520 = sbr.rel (%p518) target = $region68
        $region67: #{tpu_custom_call.1} parent=23 // pred_region
          %p521 = scmp.lt.s32.totalorder %s25, 1
          %s522 = scalar_select %p521, %s25, 1
          %s523 = scalar_lea.vmem %s12, %s522
        $region68: #{tpu_custom_call.1} parent=23 // pred_fallthru
          _
        // Predicated region
        $region69: #{tpu_custom_call.1} parent=23 // pred_check
          %p524 = pneg %p373
        $region70: #{tpu_custom_call.1} parent=23 // pred_check_branch
          %526 = sbr.rel (%p524) target = $region72
        $region71: #{tpu_custom_call.1} parent=23 // pred_region
          %p527 = scmp.lt.s32.totalorder %s25, 1
          %s528 = scalar_select %p527, %s25, 1
          %s529 = scalar_lea.vmem %s13, %s528
        $region72: #{tpu_custom_call.1} parent=23 // pred_fallthru
          _
      $region24: #{tpu_custom_call.1} parent=5 // pred_fallthru
        _
      %p530 = scmp.le.s32.totalorder 1, %s25
      %p531 = scmp.lt.s32.totalorder %s25, 3
      %p532 = pnand %p530, %p531
      %p533 = pneg %p532
      // Predicated region
      $region73: #{tpu_custom_call.1} parent=5 // pred_check
        _
      $region74: #{tpu_custom_call.1} parent=5 // pred_check_branch
        %535 = sbr.rel (%p532) target = $region76
      $region75: #{tpu_custom_call.1} parent=5 // pred_region
        %s536 = ssub.s32 %s25, 1
        // Predicated region
        $region77: #{tpu_custom_call.1} parent=75 // pred_check
          %p537 = pneg %p46
        $region78: #{tpu_custom_call.1} parent=75 // pred_check_branch
          %539 = sbr.rel (%p537) target = $region80
        $region79: #{tpu_custom_call.1} parent=75 // pred_region
          %540 = dma.done [#allocation4], 256
        $region80: #{tpu_custom_call.1} parent=75 // pred_fallthru
          _
        // Predicated region
        $region81: #{tpu_custom_call.1} parent=75 // pred_check
          %p541 = pneg %p67
        $region82: #{tpu_custom_call.1} parent=75 // pred_check_branch
          %543 = sbr.rel (%p541) target = $region84
        $region83: #{tpu_custom_call.1} parent=75 // pred_region
          %544 = dma.done [#allocation7], 32
        $region84: #{tpu_custom_call.1} parent=75 // pred_fallthru
          _
        %p545 = pneg %p46
        %p546 = pneg %p43
        %p547 = pneg %p67
        %p548 = pneg %p64
        %p549 = scmp.lt.s32.totalorder %s30, 1
        %s550 = scalar_select %p549, %s30, 1
        %s551 = smul.addr %s550, 4
        %s552 = smul.addr %s551, 4
        %s553 = scalar_lea.vmem %s2, %s552
        %p554 = pneg %p93
        %p555 = pneg %p90
        %p556 = scmp.lt.s32.totalorder %s30, 1
        %s557 = scalar_select %p556, %s30, 1
        %s558 = scalar_lea.vmem %s3, %s557
        %p559 = pneg %p119
        %p560 = pneg %p116
        %p561 = scmp.lt.s32.totalorder %s30, 1
        %s562 = scalar_select %p561, %s30, 1
        %s563 = smul.addr %s562, 4
        %s564 = smul.addr %s563, 4
        %s565 = scalar_lea.vmem %s4, %s564
        %p566 = pneg %p145
        %p567 = pneg %p142
        %p568 = scmp.lt.s32.totalorder %s30, 1
        %s569 = scalar_select %p568, %s30, 1
        %s570 = scalar_lea.vmem %s5, %s569
        %p571 = pneg %p171
        %p572 = pneg %p168
        %p573 = scmp.lt.s32.totalorder %s30, 1
        %s574 = scalar_select %p573, %s30, 1
        %s575 = scalar_lea.vmem %s6, %s574
        %p576 = pneg %p197
        %p577 = pneg %p194
        %p578 = scmp.lt.s32.totalorder %s30, 1
        %s579 = scalar_select %p578, %s30, 1
        %s580 = scalar_lea.vmem %s7, %s579
        %p581 = pneg %p223
        %p582 = pneg %p220
        %p583 = scmp.lt.s32.totalorder %s30, 1
        %s584 = scalar_select %p583, %s30, 1
        %s585 = smul.addr %s584, 4
        %s586 = smul.addr %s585, 4
        %s587 = scalar_lea.vmem %s8, %s586
        %p588 = pneg %p249
        %p589 = pneg %p246
        %p590 = scmp.lt.s32.totalorder %s30, 1
        %s591 = scalar_select %p590, %s30, 1
        %s592 = scalar_lea.vmem %s9, %s591
        %p593 = pneg %p275
        %p594 = pneg %p272
        %p595 = scmp.lt.s32.totalorder %s30, 1
        %s596 = scalar_select %p595, %s30, 1
        %s597 = smul.addr %s596, 8
        %s598 = smul.addr %s597, 4
        %s599 = scalar_lea.vmem %s10, %s598
        %p600 = pneg %p301
        %p601 = pneg %p298
        %p602 = scmp.lt.s32.totalorder %s30, 1
        %s603 = scalar_select %p602, %s30, 1
        %s604 = scalar_lea.vmem %s11, %s603
        %p605 = pneg %p327
        %p606 = pneg %p324
        %p607 = scmp.lt.s32.totalorder %s30, 1
        %s608 = scalar_select %p607, %s30, 1
        %s609 = scalar_lea.vmem %s12, %s608
        %p610 = pneg %p353
        %p611 = pneg %p350
        %p612 = scmp.lt.s32.totalorder %s30, 1
        %s613 = scalar_select %p612, %s30, 1
        %s614 = scalar_lea.vmem %s13, %s613
        %p615 = pneg %p379
        %p616 = pneg %p376
        %p617 = pneg %p405
        %p618 = pneg %p402
        %s619 = sand.u32 %s392, 1
        %s620 = scalar_lea.sflag [#allocation5], %s619
        %s621 = sand.u32 %s392, 1
        %s622 = smul.addr %s621, 16
        %s623 = scalar_lea.vmem [#allocation8], %s622
        %p624 = scmp.lt.s32.totalorder %s30, 1
        %s625 = scalar_select %p624, %s30, 1
        %s626 = smul.addr %s625, 4
        %s627 = smul.addr %s626, 4
        %s628 = scalar_lea.vmem %s2, %s627
        %p629 = scmp.lt.s32.totalorder %s30, 1
        %s630 = scalar_select %p629, %s30, 1
        %s631 = scalar_lea.vmem %s3, %s630
        %p632 = scmp.lt.s32.totalorder %s30, 1
        %s633 = scalar_select %p632, %s30, 1
        %s634 = smul.addr %s633, 4
        %s635 = smul.addr %s634, 4
        %s636 = scalar_lea.vmem %s4, %s635
        %p637 = scmp.lt.s32.totalorder %s30, 1
        %s638 = scalar_select %p637, %s30, 1
        %s639 = scalar_lea.vmem %s5, %s638
        %p640 = scmp.lt.s32.totalorder %s30, 1
        %s641 = scalar_select %p640, %s30, 1
        %s642 = scalar_lea.vmem %s6, %s641
        %p643 = scmp.lt.s32.totalorder %s30, 1
        %s644 = scalar_select %p643, %s30, 1
        %s645 = scalar_lea.vmem %s7, %s644
        %p646 = scmp.lt.s32.totalorder %s30, 1
        %s647 = scalar_select %p646, %s30, 1
        %s648 = smul.addr %s647, 4
        %s649 = smul.addr %s648, 4
        %s650 = scalar_lea.vmem %s8, %s649
        %p651 = scmp.lt.s32.totalorder %s30, 1
        %s652 = scalar_select %p651, %s30, 1
        %s653 = scalar_lea.vmem %s9, %s652
        %p654 = scmp.lt.s32.totalorder %s30, 1
        %s655 = scalar_select %p654, %s30, 1
        %s656 = smul.addr %s655, 8
        %s657 = smul.addr %s656, 4
        %s658 = scalar_lea.vmem %s10, %s657
        %p659 = scmp.lt.s32.totalorder %s30, 1
        %s660 = scalar_select %p659, %s30, 1
        %s661 = scalar_lea.vmem %s11, %s660
        %p662 = scmp.lt.s32.totalorder %s30, 1
        %s663 = scalar_select %p662, %s30, 1
        %s664 = scalar_lea.vmem %s12, %s663
        %p665 = scmp.lt.s32.totalorder %s30, 1
        %s666 = scalar_select %p665, %s30, 1
        %s667 = scalar_lea.vmem %s13, %s666
        %p669 = scmp.eq.s32.totalorder %s30, 0
        // Predicated region
        $region85: #{tpu_custom_call.1} parent=75 // pred_check
          %p670 = pneg %p669
        $region86: #{tpu_custom_call.1} parent=75 // pred_check_branch
          %672 = sbr.rel (%p670) target = $region88
        $region87: #{tpu_custom_call.1} parent=75 // pred_region
          %v673 = vld [vmem:[#allocation3] sm:$0xff]
          %v674 = vld [vmem:[#allocation3 + $0x8] sm:$0xff]
          %vm675 = vcmask 261120
          %676 = vst.msk [vmem:[#allocation2] sm:$0xff] %vm675, %v673
          %677 = vst.msk [vmem:[#allocation2 + $0x8] sm:$0xff] %vm675, %v674
        $region88: #{tpu_custom_call.1} parent=75 // pred_fallthru
          _
        %v678 = vld [vmem:[#allocation2] sm:$0xff]
        %v679 = vld [vmem:[#allocation2 + $0x8] sm:$0xff]
        %v680 = vld [vmem:[#allocation6] sm:$0x1]
        %v681 = vld [vmem:[#allocation6 + $0x1] sm:$0x1]
        %v682 = vpack.c.bf16 %v679, %v678
        %v683 = vld [vmem:[%s628] sm:$0xf]
        %v684 = vld [vmem:[%s628 + $0x4] sm:$0xf]
        %v685 = vld [vmem:[%s628 + $0x8] sm:$0xf]
        %v686 = vld [vmem:[%s628 + $0xc] sm:$0xf]
        %v687 = vld [vmem:[%s631] sm:$0x1]
        %v689 = vlaneseq
        %v690 = vshrl.u32 %v689, 7
        %v691 = vsub.s32 0, %v690
        %v692 = vrot.slane %v687, %v691
        %v698 = vunpack.c.l.b16 %v683
        %v699 = vunpack.c.l.b16 %v684
        %v700 = vunpack.c.l.b16 %v685
        %v701 = vunpack.c.l.b16 %v686
        %v702 = vpack.c.b16 %v699, %v698
        %v703 = vpack.c.b16 %v701, %v700
        %vm706 = vcmask 261120
        %v708 = vsel %vm706, %v682, 0
        %710 = vmatprep.subr.bf16.mxu0 0
        %711 = vmatpush1.bf16.msra.mxu0 0
        %712 = vmatprep.subr.bf16.mxu0 0
        %713 = vmatpush1.bf16.msra.mxu0 0
        %714 = vmatprep.subr.bf16.mxu0 0
        %715 = vmatpush1.bf16.msra.mxu0 0
        %716 = vmatprep.subr.bf16.mxu0 0
        %717 = vmatpush1.bf16.msra.mxu0 0
        %718 = vmatprep.subr.bf16.mxu0 0
        %719 = vmatpush1.bf16.msra.mxu0 0
        %720 = vmatprep.subr.bf16.mxu0 0
        %721 = vmatpush1.bf16.msra.mxu0 0
        %722 = vmatprep.subr.bf16.mxu0 0
        %723 = vmatpush1.bf16.msra.mxu0 %v703
        %724 = vmatprep.subr.bf16.mxu0 0
        %725 = vmatpush1.bf16.msra.mxu0 %v702
        %726 = vmatprep.subr.bf16.mxu0 0
        %727 = vmatpush2.bf16.msra.mxu0 0
        %728 = vmatprep.subr.bf16.mxu0 0
        %729 = vmatpush2.bf16.msra.mxu0 0
        %730 = vmatprep.subr.bf16.mxu0 0
        %731 = vmatpush2.bf16.msra.mxu0 0
        %732 = vmatprep.subr.bf16.mxu0 0
        %733 = vmatpush2.bf16.msra.mxu0 0
        %734 = vmatprep.subr.bf16.mxu0 0
        %735 = vmatpush2.bf16.msra.mxu0 0
        %736 = vmatprep.subr.bf16.mxu0 0
        %737 = vmatpush2.bf16.msra.mxu0 0
        %738 = vmatprep.subr.bf16.mxu0 0
        %739 = vmatpush2.bf16.msra.mxu0 0
        %740 = vmatprep.subr.bf16.mxu0 0
        %741 = vmatpush2.bf16.msra.mxu0 0
        %742 = vmatprep.mubr.bf16.mxu0 0
        %743 = vmatmul.mubr.bf16.gmra.mxu0 %v708
        %v744 = vpop.f32.mrf.mxu0
        %v745 = vadd.f32 %v692, %v744
        %v746 = vpop.f32.mrf.mxu0
        %v747 = vpop.f32.mrf.mxu0
        %v748 = vadd.f32 %v692, %v747
        %v749 = vpop.f32.mrf.mxu0
        %750 = vdwg.mxu0
        %v751 = vpack.c.bf16 %v745, %v745
        %v752 = vpack.c.bf16 %v748, %v748
        %754 = vrot.lane.b32.xlu0 %v751, 96
        %v755 = vpop.permute.xlu0 %754
        %vm756 = vcmask 64512
        %v758 = vsel %vm756, %v751, 0
        %v761 = vsel %vm756, %v755, 0
        %763 = vmatprep.subr.bf16.mxu0 0
        %764 = vmatpush1.bf16.xpose.msra.mxu0 0
        %765 = vmatprep.subr.bf16.mxu0 0
        %766 = vmatpush1.bf16.xpose.msra.mxu0 0
        %767 = vmatprep.subr.bf16.mxu0 0
        %768 = vmatpush1.bf16.xpose.msra.mxu0 0
        %769 = vmatprep.subr.bf16.mxu0 0
        %770 = vmatpush1.bf16.xpose.msra.mxu0 0
        %771 = vmatprep.subr.bf16.mxu0 0
        %772 = vmatpush1.bf16.xpose.msra.mxu0 0
        %773 = vmatprep.subr.bf16.mxu0 0
        %774 = vmatpush1.bf16.xpose.msra.mxu0 0
        %775 = vmatprep.subr.bf16.mxu0 0
        %776 = vmatpush1.bf16.xpose.msra.mxu0 0
        %777 = vmatprep.subr.bf16.mxu0 0
        %778 = vmatpush1.bf16.xpose.msra.mxu0 %v761
        %779 = vmatprep.subr.bf16.mxu0 0
        %780 = vmatpush2.bf16.xpose.msra.mxu0 0
        %781 = vmatprep.subr.bf16.mxu0 0
        %782 = vmatpush2.bf16.xpose.msra.mxu0 0
        %783 = vmatprep.subr.bf16.mxu0 0
        %784 = vmatpush2.bf16.xpose.msra.mxu0 0
        %785 = vmatprep.subr.bf16.mxu0 0
        %786 = vmatpush2.bf16.xpose.msra.mxu0 0
        %787 = vmatprep.subr.bf16.mxu0 0
        %788 = vmatpush2.bf16.xpose.msra.mxu0 0
        %789 = vmatprep.subr.bf16.mxu0 0
        %790 = vmatpush2.bf16.xpose.msra.mxu0 0
        %791 = vmatprep.subr.bf16.mxu0 0
        %792 = vmatpush2.bf16.xpose.msra.mxu0 0
        %793 = vmatprep.subr.bf16.mxu0 0
        %794 = vmatpush2.bf16.xpose.msra.mxu0 0
        %795 = vmatprep.mubr.bf16.mxu0 0
        %796 = vmatmul.mubr.bf16.gmra.mxu0 %v758
        %v797 = vpop.f32.mrf.mxu0
        %v798 = vadd.f32 0.0, %v797
        %v799 = vpop.f32.mrf.mxu0
        %v800 = vpop.f32.mrf.mxu0
        %v801 = vpop.f32.mrf.mxu0
        %802 = vdwg.mxu0
        %804 = vrot.lane.b32.xlu0 %v752, 96
        %v805 = vpop.permute.xlu0 %804
        %v807 = vsel %vm756, %v752, 0
        %v810 = vsel %vm756, %v805, 0
        %812 = vmatprep.subr.bf16.mxu0 0
        %813 = vmatpush1.bf16.xpose.msra.mxu0 0
        %814 = vmatprep.subr.bf16.mxu0 0
        %815 = vmatpush1.bf16.xpose.msra.mxu0 0
        %816 = vmatprep.subr.bf16.mxu0 0
        %817 = vmatpush1.bf16.xpose.msra.mxu0 0
        %818 = vmatprep.subr.bf16.mxu0 0
        %819 = vmatpush1.bf16.xpose.msra.mxu0 0
        %820 = vmatprep.subr.bf16.mxu0 0
        %821 = vmatpush1.bf16.xpose.msra.mxu0 0
        %822 = vmatprep.subr.bf16.mxu0 0
        %823 = vmatpush1.bf16.xpose.msra.mxu0 0
        %824 = vmatprep.subr.bf16.mxu0 0
        %825 = vmatpush1.bf16.xpose.msra.mxu0 0
        %826 = vmatprep.subr.bf16.mxu0 0
        %827 = vmatpush1.bf16.xpose.msra.mxu0 %v810
        %828 = vmatprep.subr.bf16.mxu0 0
        %829 = vmatpush2.bf16.xpose.msra.mxu0 0
        %830 = vmatprep.subr.bf16.mxu0 0
        %831 = vmatpush2.bf16.xpose.msra.mxu0 0
        %832 = vmatprep.subr.bf16.mxu0 0
        %833 = vmatpush2.bf16.xpose.msra.mxu0 0
        %834 = vmatprep.subr.bf16.mxu0 0
        %835 = vmatpush2.bf16.xpose.msra.mxu0 0
        %836 = vmatprep.subr.bf16.mxu0 0
        %837 = vmatpush2.bf16.xpose.msra.mxu0 0
        %838 = vmatprep.subr.bf16.mxu0 0
        %839 = vmatpush2.bf16.xpose.msra.mxu0 0
        %840 = vmatprep.subr.bf16.mxu0 0
        %841 = vmatpush2.bf16.xpose.msra.mxu0 0
        %842 = vmatprep.subr.bf16.mxu0 0
        %843 = vmatpush2.bf16.xpose.msra.mxu0 0
        %844 = vmatprep.mubr.bf16.mxu0 0
        %845 = vmatmul.mubr.bf16.gmra.mxu0 %v807
        %v846 = vpop.f32.mrf.mxu0
        %v847 = vadd.f32 0.0, %v846
        %v848 = vpop.f32.mrf.mxu0
        %v849 = vpop.f32.mrf.mxu0
        %v850 = vpop.f32.mrf.mxu0
        %851 = vdwg.mxu0
        %v852 = vmul.f32 %v798, 0.35355338
        %v853 = vmul.f32 %v847, 0.35355338
        %v856 = vlaneseq
        %v857 = vshrl.u32 %v856, 7
        %v858 = vsub.s32 0, %v857
        %v859 = vrot.slane %v680, %v858
        %v860 = vlaneseq
        %v861 = vshrl.u32 %v860, 7
        %v862 = vsub.s32 0, %v861
        %v863 = vrot.slane %v681, %v862
        %v866 = vadd.f32 %v852, %v859
        %v867 = vadd.f32 %v853, %v863
        %v868 = vsel %vm756, %v866, -inf
        %869 = vmax.xlane.f32.xlu0 %v868
        %v870 = vpop.xlane.xlu0 %869
        %v871 = vsel %vm756, %v867, -inf
        %872 = vmax.xlane.f32.xlu0 %v871
        %v873 = vpop.xlane.xlu0 %872
        %v874 = vsub.f32 %v866, %v870
        %v875 = vsub.f32 %v867, %v873
        %v876 = vmul.f32 %v874, 1.442695
        %v877 = vpow.pop %v876
        %v878 = vmul.f32 %v875, 1.442695
        %v879 = vpow.pop %v878
        %v880 = vsel %vm756, %v877, 0.0
        %881 = vadd.xlane.f32.xlu0 %v880
        %v882 = vpop.xlane.xlu0 %881
        %v883 = vsel %vm756, %v879, 0.0
        %884 = vadd.xlane.f32.xlu0 %v883
        %v885 = vpop.xlane.xlu0 %884
        %v886 = vrcp.pop %v882
        %v887 = vrcp.pop %v885
        %v888 = vmul.f32 %v877, %v886
        %v889 = vmul.f32 %v879, %v887
        %v890 = vpack.c.bf16 %v888, %v888
        %v891 = vpack.c.bf16 %v889, %v889
        %892 = vrot.lane.b32.xlu0 %v751, 64
        %v893 = vpop.permute.xlu0 %892
        %v895 = vsel %vm756, %v890, 0
        %vm897 = vcmask 1043456
        %v899 = vsel %vm897, %v893, 0
        %901 = vmatprep.subr.bf16.mxu0 0
        %902 = vmatpush1.bf16.msra.mxu0 0
        %903 = vmatprep.subr.bf16.mxu0 0
        %904 = vmatpush1.bf16.msra.mxu0 0
        %905 = vmatprep.subr.bf16.mxu0 0
        %906 = vmatpush1.bf16.msra.mxu0 0
        %907 = vmatprep.subr.bf16.mxu0 0
        %908 = vmatpush1.bf16.msra.mxu0 0
        %909 = vmatprep.subr.bf16.mxu0 0
        %910 = vmatpush1.bf16.msra.mxu0 0
        %911 = vmatprep.subr.bf16.mxu0 0
        %912 = vmatpush1.bf16.msra.mxu0 0
        %913 = vmatprep.subr.bf16.mxu0 0
        %914 = vmatpush1.bf16.msra.mxu0 0
        %915 = vmatprep.subr.bf16.mxu0 0
        %916 = vmatpush1.bf16.msra.mxu0 %v899
        %917 = vmatprep.subr.bf16.mxu0 0
        %918 = vmatpush2.bf16.msra.mxu0 0
        %919 = vmatprep.subr.bf16.mxu0 0
        %920 = vmatpush2.bf16.msra.mxu0 0
        %921 = vmatprep.subr.bf16.mxu0 0
        %922 = vmatpush2.bf16.msra.mxu0 0
        %923 = vmatprep.subr.bf16.mxu0 0
        %924 = vmatpush2.bf16.msra.mxu0 0
        %925 = vmatprep.subr.bf16.mxu0 0
        %926 = vmatpush2.bf16.msra.mxu0 0
        %927 = vmatprep.subr.bf16.mxu0 0
        %928 = vmatpush2.bf16.msra.mxu0 0
        %929 = vmatprep.subr.bf16.mxu0 0
        %930 = vmatpush2.bf16.msra.mxu0 0
        %931 = vmatprep.subr.bf16.mxu0 0
        %932 = vmatpush2.bf16.msra.mxu0 0
        %933 = vmatprep.mubr.bf16.mxu0 0
        %934 = vmatmul.mubr.bf16.gmra.mxu0 %v895
        %v935 = vpop.f32.mrf.mxu0
        %v936 = vadd.f32 0.0, %v935
        %v937 = vpop.f32.mrf.mxu0
        %v938 = vpop.f32.mrf.mxu0
        %v939 = vpop.f32.mrf.mxu0
        %940 = vdwg.mxu0
        %941 = vrot.lane.b32.xlu0 %v752, 64
        %v942 = vpop.permute.xlu0 %941
        %v944 = vsel %vm756, %v891, 0
        %v947 = vsel %vm897, %v942, 0
        %949 = vmatprep.subr.bf16.mxu0 0
        %950 = vmatpush1.bf16.msra.mxu0 0
        %951 = vmatprep.subr.bf16.mxu0 0
        %952 = vmatpush1.bf16.msra.mxu0 0
        %953 = vmatprep.subr.bf16.mxu0 0
        %954 = vmatpush1.bf16.msra.mxu0 0
        %955 = vmatprep.subr.bf16.mxu0 0
        %956 = vmatpush1.bf16.msra.mxu0 0
        %957 = vmatprep.subr.bf16.mxu0 0
        %958 = vmatpush1.bf16.msra.mxu0 0
        %959 = vmatprep.subr.bf16.mxu0 0
        %960 = vmatpush1.bf16.msra.mxu0 0
        %961 = vmatprep.subr.bf16.mxu0 0
        %962 = vmatpush1.bf16.msra.mxu0 0
        %963 = vmatprep.subr.bf16.mxu0 0
        %964 = vmatpush1.bf16.msra.mxu0 %v947
        %965 = vmatprep.subr.bf16.mxu0 0
        %966 = vmatpush2.bf16.msra.mxu0 0
        %967 = vmatprep.subr.bf16.mxu0 0
        %968 = vmatpush2.bf16.msra.mxu0 0
        %969 = vmatprep.subr.bf16.mxu0 0
        %970 = vmatpush2.bf16.msra.mxu0 0
        %971 = vmatprep.subr.bf16.mxu0 0
        %972 = vmatpush2.bf16.msra.mxu0 0
        %973 = vmatprep.subr.bf16.mxu0 0
        %974 = vmatpush2.bf16.msra.mxu0 0
        %975 = vmatprep.subr.bf16.mxu0 0
        %976 = vmatpush2.bf16.msra.mxu0 0
        %977 = vmatprep.subr.bf16.mxu0 0
        %978 = vmatpush2.bf16.msra.mxu0 0
        %979 = vmatprep.subr.bf16.mxu0 0
        %980 = vmatpush2.bf16.msra.mxu0 0
        %981 = vmatprep.mubr.bf16.mxu0 0
        %982 = vmatmul.mubr.bf16.gmra.mxu0 %v944
        %v983 = vpop.f32.mrf.mxu0
        %v984 = vadd.f32 0.0, %v983
        %v985 = vpop.f32.mrf.mxu0
        %v986 = vpop.f32.mrf.mxu0
        %v987 = vpop.f32.mrf.mxu0
        %988 = vdwg.mxu0
        %v989 = vpack.c.bf16 %v984, %v936
        %v990 = vld [vmem:[%s636] sm:$0xf]
        %991 = vrot.lane.b32.xlu0 %v751, 120
        %v992 = vpop.permute.xlu0 %991
        %993 = vrot.lane.b32.xlu0 %v751, 88
        %v994 = vpop.permute.xlu0 %993
        %v996 = vsel %vm756, %v992, 0
        %v999 = vsel %vm756, %v994, 0
        %1001 = vmatprep.subr.bf16.mxu0 0
        %1002 = vmatpush1.bf16.xpose.msra.mxu0 0
        %1003 = vmatprep.subr.bf16.mxu0 0
        %1004 = vmatpush1.bf16.xpose.msra.mxu0 0
        %1005 = vmatprep.subr.bf16.mxu0 0
        %1006 = vmatpush1.bf16.xpose.msra.mxu0 0
        %1007 = vmatprep.subr.bf16.mxu0 0
        %1008 = vmatpush1.bf16.xpose.msra.mxu0 0
        %1009 = vmatprep.subr.bf16.mxu0 0
        %1010 = vmatpush1.bf16.xpose.msra.mxu0 0
        %1011 = vmatprep.subr.bf16.mxu0 0
        %1012 = vmatpush1.bf16.xpose.msra.mxu0 0
        %1013 = vmatprep.subr.bf16.mxu0 0
        %1014 = vmatpush1.bf16.xpose.msra.mxu0 0
        %1015 = vmatprep.subr.bf16.mxu0 0
        %1016 = vmatpush1.bf16.xpose.msra.mxu0 %v999
        %1017 = vmatprep.subr.bf16.mxu0 0
        %1018 = vmatpush2.bf16.xpose.msra.mxu0 0
        %1019 = vmatprep.subr.bf16.mxu0 0
        %1020 = vmatpush2.bf16.xpose.msra.mxu0 0
        %1021 = vmatprep.subr.bf16.mxu0 0
        %1022 = vmatpush2.bf16.xpose.msra.mxu0 0
        %1023 = vmatprep.subr.bf16.mxu0 0
        %1024 = vmatpush2.bf16.xpose.msra.mxu0 0
        %1025 = vmatprep.subr.bf16.mxu0 0
        %1026 = vmatpush2.bf16.xpose.msra.mxu0 0
        %1027 = vmatprep.subr.bf16.mxu0 0
        %1028 = vmatpush2.bf16.xpose.msra.mxu0 0
        %1029 = vmatprep.subr.bf16.mxu0 0
        %1030 = vmatpush2.bf16.xpose.msra.mxu0 0
        %1031 = vmatprep.subr.bf16.mxu0 0
        %1032 = vmatpush2.bf16.xpose.msra.mxu0 0
        %1033 = vmatprep.mubr.bf16.mxu0 0
        %1034 = vmatmul.mubr.bf16.gmra.mxu0 %v996
        %v1035 = vpop.f32.mrf.mxu0
        %v1036 = vadd.f32 0.0, %v1035
        %v1037 = vpop.f32.mrf.mxu0
        %v1038 = vpop.f32.mrf.mxu0
        %v1039 = vpop.f32.mrf.mxu0
        %1040 = vdwg.mxu0
        %1041 = vrot.lane.b32.xlu0 %v752, 120
        %v1042 = vpop.permute.xlu0 %1041
        %1043 = vrot.lane.b32.xlu0 %v752, 88
        %v1044 = vpop.permute.xlu0 %1043
        %v1046 = vsel %vm756, %v1042, 0
        %v1049 = vsel %vm756, %v1044, 0
        %1051 = vmatprep.subr.bf16.mxu0 0
        %1052 = vmatpush1.bf16.xpose.msra.mxu0 0
        %1053 = vmatprep.subr.bf16.mxu0 0
        %1054 = vmatpush1.bf16.xpose.msra.mxu0 0
        %1055 = vmatprep.subr.bf16.mxu0 0
        %1056 = vmatpush1.bf16.xpose.msra.mxu0 0
        %1057 = vmatprep.subr.bf16.mxu0 0
        %1058 = vmatpush1.bf16.xpose.msra.mxu0 0
        %1059 = vmatprep.subr.bf16.mxu0 0
        %1060 = vmatpush1.bf16.xpose.msra.mxu0 0
        %1061 = vmatprep.subr.bf16.mxu0 0
        %1062 = vmatpush1.bf16.xpose.msra.mxu0 0
        %1063 = vmatprep.subr.bf16.mxu0 0
        %1064 = vmatpush1.bf16.xpose.msra.mxu0 0
        %1065 = vmatprep.subr.bf16.mxu0 0
        %1066 = vmatpush1.bf16.xpose.msra.mxu0 %v1049
        %1067 = vmatprep.subr.bf16.mxu0 0
        %1068 = vmatpush2.bf16.xpose.msra.mxu0 0
        %1069 = vmatprep.subr.bf16.mxu0 0
        %1070 = vmatpush2.bf16.xpose.msra.mxu0 0
        %1071 = vmatprep.subr.bf16.mxu0 0
        %1072 = vmatpush2.bf16.xpose.msra.mxu0 0
        %1073 = vmatprep.subr.bf16.mxu0 0
        %1074 = vmatpush2.bf16.xpose.msra.mxu0 0
        %1075 = vmatprep.subr.bf16.mxu0 0
        %1076 = vmatpush2.bf16.xpose.msra.mxu0 0
        %1077 = vmatprep.subr.bf16.mxu0 0
        %1078 = vmatpush2.bf16.xpose.msra.mxu0 0
        %1079 = vmatprep.subr.bf16.mxu0 0
        %1080 = vmatpush2.bf16.xpose.msra.mxu0 0
        %1081 = vmatprep.subr.bf16.mxu0 0
        %1082 = vmatpush2.bf16.xpose.msra.mxu0 0
        %1083 = vmatprep.mubr.bf16.mxu0 0
        %1084 = vmatmul.mubr.bf16.gmra.mxu0 %v1046
        %v1085 = vpop.f32.mrf.mxu0
        %v1086 = vadd.f32 0.0, %v1085
        %v1087 = vpop.f32.mrf.mxu0
        %v1088 = vpop.f32.mrf.mxu0
        %v1089 = vpop.f32.mrf.mxu0
        %1090 = vdwg.mxu0
        %v1091 = vmul.f32 %v1036, 0.35355338
        %v1092 = vmul.f32 %v1086, 0.35355338
        %v1093 = vadd.f32 %v1091, %v859
        %v1094 = vadd.f32 %v1092, %v863
        %v1095 = vsel %vm756, %v1093, -inf
        %1096 = vmax.xlane.f32.xlu0 %v1095
        %v1097 = vpop.xlane.xlu0 %1096
        %v1098 = vsel %vm756, %v1094, -inf
        %1099 = vmax.xlane.f32.xlu0 %v1098
        %v1100 = vpop.xlane.xlu0 %1099
        %v1101 = vsub.f32 %v1093, %v1097
        %v1102 = vsub.f32 %v1094, %v1100
        %v1103 = vmul.f32 %v1101, 1.442695
        %v1104 = vpow.pop %v1103
        %v1105 = vmul.f32 %v1102, 1.442695
        %v1106 = vpow.pop %v1105
        %v1107 = vsel %vm756, %v1104, 0.0
        %1108 = vadd.xlane.f32.xlu0 %v1107
        %v1109 = vpop.xlane.xlu0 %1108
        %v1110 = vsel %vm756, %v1106, 0.0
        %1111 = vadd.xlane.f32.xlu0 %v1110
        %v1112 = vpop.xlane.xlu0 %1111
        %v1113 = vrcp.pop %v1109
        %v1114 = vrcp.pop %v1112
        %v1115 = vmul.f32 %v1104, %v1113
        %v1116 = vmul.f32 %v1106, %v1114
        %v1117 = vpack.c.bf16 %v1115, %v1115
        %v1118 = vpack.c.bf16 %v1116, %v1116
        %1119 = vrot.lane.b32.xlu0 %v751, 56
        %v1120 = vpop.permute.xlu0 %1119
        %v1122 = vsel %vm756, %v1117, 0
        %v1125 = vsel %vm897, %v1120, 0
        %1127 = vmatprep.subr.bf16.mxu0 0
        %1128 = vmatpush1.bf16.msra.mxu0 0
        %1129 = vmatprep.subr.bf16.mxu0 0
        %1130 = vmatpush1.bf16.msra.mxu0 0
        %1131 = vmatprep.subr.bf16.mxu0 0
        %1132 = vmatpush1.bf16.msra.mxu0 0
        %1133 = vmatprep.subr.bf16.mxu0 0
        %1134 = vmatpush1.bf16.msra.mxu0 0
        %1135 = vmatprep.subr.bf16.mxu0 0
        %1136 = vmatpush1.bf16.msra.mxu0 0
        %1137 = vmatprep.subr.bf16.mxu0 0
        %1138 = vmatpush1.bf16.msra.mxu0 0
        %1139 = vmatprep.subr.bf16.mxu0 0
        %1140 = vmatpush1.bf16.msra.mxu0 0
        %1141 = vmatprep.subr.bf16.mxu0 0
        %1142 = vmatpush1.bf16.msra.mxu0 %v1125
        %1143 = vmatprep.subr.bf16.mxu0 0
        %1144 = vmatpush2.bf16.msra.mxu0 0
        %1145 = vmatprep.subr.bf16.mxu0 0
        %1146 = vmatpush2.bf16.msra.mxu0 0
        %1147 = vmatprep.subr.bf16.mxu0 0
        %1148 = vmatpush2.bf16.msra.mxu0 0
        %1149 = vmatprep.subr.bf16.mxu0 0
        %1150 = vmatpush2.bf16.msra.mxu0 0
        %1151 = vmatprep.subr.bf16.mxu0 0
        %1152 = vmatpush2.bf16.msra.mxu0 0
        %1153 = vmatprep.subr.bf16.mxu0 0
        %1154 = vmatpush2.bf16.msra.mxu0 0
        %1155 = vmatprep.subr.bf16.mxu0 0
        %1156 = vmatpush2.bf16.msra.mxu0 0
        %1157 = vmatprep.subr.bf16.mxu0 0
        %1158 = vmatpush2.bf16.msra.mxu0 0
        %1159 = vmatprep.mubr.bf16.mxu0 0
        %1160 = vmatmul.mubr.bf16.gmra.mxu0 %v1122
        %v1161 = vpop.f32.mrf.mxu0
        %v1162 = vadd.f32 0.0, %v1161
        %v1163 = vpop.f32.mrf.mxu0
        %v1164 = vpop.f32.mrf.mxu0
        %v1165 = vpop.f32.mrf.mxu0
        %1166 = vdwg.mxu0
        %1167 = vrot.lane.b32.xlu0 %v752, 56
        %v1168 = vpop.permute.xlu0 %1167
        %v1170 = vsel %vm756, %v1118, 0
        %v1173 = vsel %vm897, %v1168, 0
        %1175 = vmatprep.subr.bf16.mxu0 0
        %1176 = vmatpush1.bf16.msra.mxu0 0
        %1177 = vmatprep.subr.bf16.mxu0 0
        %1178 = vmatpush1.bf16.msra.mxu0 0
        %1179 = vmatprep.subr.bf16.mxu0 0
        %1180 = vmatpush1.bf16.msra.mxu0 0
        %1181 = vmatprep.subr.bf16.mxu0 0
        %1182 = vmatpush1.bf16.msra.mxu0 0
        %1183 = vmatprep.subr.bf16.mxu0 0
        %1184 = vmatpush1.bf16.msra.mxu0 0
        %1185 = vmatprep.subr.bf16.mxu0 0
        %1186 = vmatpush1.bf16.msra.mxu0 0
        %1187 = vmatprep.subr.bf16.mxu0 0
        %1188 = vmatpush1.bf16.msra.mxu0 0
        %1189 = vmatprep.subr.bf16.mxu0 0
        %1190 = vmatpush1.bf16.msra.mxu0 %v1173
        %1191 = vmatprep.subr.bf16.mxu0 0
        %1192 = vmatpush2.bf16.msra.mxu0 0
        %1193 = vmatprep.subr.bf16.mxu0 0
        %1194 = vmatpush2.bf16.msra.mxu0 0
        %1195 = vmatprep.subr.bf16.mxu0 0
        %1196 = vmatpush2.bf16.msra.mxu0 0
        %1197 = vmatprep.subr.bf16.mxu0 0
        %1198 = vmatpush2.bf16.msra.mxu0 0
        %1199 = vmatprep.subr.bf16.mxu0 0
        %1200 = vmatpush2.bf16.msra.mxu0 0
        %1201 = vmatprep.subr.bf16.mxu0 0
        %1202 = vmatpush2.bf16.msra.mxu0 0
        %1203 = vmatprep.subr.bf16.mxu0 0
        %1204 = vmatpush2.bf16.msra.mxu0 0
        %1205 = vmatprep.subr.bf16.mxu0 0
        %1206 = vmatpush2.bf16.msra.mxu0 0
        %1207 = vmatprep.mubr.bf16.mxu0 0
        %1208 = vmatmul.mubr.bf16.gmra.mxu0 %v1170
        %v1209 = vpop.f32.mrf.mxu0
        %v1210 = vadd.f32 0.0, %v1209
        %v1211 = vpop.f32.mrf.mxu0
        %v1212 = vpop.f32.mrf.mxu0
        %v1213 = vpop.f32.mrf.mxu0
        %1214 = vdwg.mxu0
        %v1215 = vpack.c.bf16 %v1210, %v1162
        %s1216 = scalar_lea.vmem %s636, 4
        %v1217 = vld [vmem:[%s1216] sm:$0xf]
        %v1219 = vsel %vm756, %v1215, 0
        %v1222 = vsel %vm897, %v1217, 0
        %1224 = vmatprep.subr.bf16.mxu0 0
        %1225 = vmatpush1.bf16.msra.mxu0 0
        %1226 = vmatprep.subr.bf16.mxu0 0
        %1227 = vmatpush1.bf16.msra.mxu0 0
        %1228 = vmatprep.subr.bf16.mxu0 0
        %1229 = vmatpush1.bf16.msra.mxu0 0
        %1230 = vmatprep.subr.bf16.mxu0 0
        %1231 = vmatpush1.bf16.msra.mxu0 0
        %1232 = vmatprep.subr.bf16.mxu0 0
        %1233 = vmatpush1.bf16.msra.mxu0 0
        %1234 = vmatprep.subr.bf16.mxu0 0
        %1235 = vmatpush1.bf16.msra.mxu0 0
        %1236 = vmatprep.subr.bf16.mxu0 0
        %1237 = vmatpush1.bf16.msra.mxu0 0
        %1238 = vmatprep.subr.bf16.mxu0 0
        %1239 = vmatpush1.bf16.msra.mxu0 %v1222
        %1240 = vmatprep.subr.bf16.mxu0 0
        %1241 = vmatpush2.bf16.msra.mxu0 0
        %1242 = vmatprep.subr.bf16.mxu0 0
        %1243 = vmatpush2.bf16.msra.mxu0 0
        %1244 = vmatprep.subr.bf16.mxu0 0
        %1245 = vmatpush2.bf16.msra.mxu0 0
        %1246 = vmatprep.subr.bf16.mxu0 0
        %1247 = vmatpush2.bf16.msra.mxu0 0
        %1248 = vmatprep.subr.bf16.mxu0 0
        %1249 = vmatpush2.bf16.msra.mxu0 0
        %1250 = vmatprep.subr.bf16.mxu0 0
        %1251 = vmatpush2.bf16.msra.mxu0 0
        %1252 = vmatprep.subr.bf16.mxu0 0
        %1253 = vmatpush2.bf16.msra.mxu0 0
        %1254 = vmatprep.subr.bf16.mxu0 0
        %1255 = vmatpush2.bf16.msra.mxu0 0
        %1256 = vmatprep.mubr.bf16.mxu0 0
        %1257 = vmatmul.mubr.bf16.gmra.mxu0 %v1219
        %v1258 = vpop.f32.mrf.mxu0
        %v1259 = vadd.f32 0.0, %v1258
        %v1260 = vpop.f32.mrf.mxu0
        %v1261 = vpop.f32.mrf.mxu0
        %v1262 = vadd.f32 0.0, %v1261
        %v1263 = vpop.f32.mrf.mxu0
        %1264 = vdwg.mxu0
        %v1266 = vsel %vm756, %v989, 0
        %v1269 = vsel %vm897, %v990, 0
        %1271 = vmatprep.subr.bf16.mxu0 0
        %1272 = vmatpush1.bf16.msra.mxu0 0
        %1273 = vmatprep.subr.bf16.mxu0 0
        %1274 = vmatpush1.bf16.msra.mxu0 0
        %1275 = vmatprep.subr.bf16.mxu0 0
        %1276 = vmatpush1.bf16.msra.mxu0 0
        %1277 = vmatprep.subr.bf16.mxu0 0
        %1278 = vmatpush1.bf16.msra.mxu0 0
        %1279 = vmatprep.subr.bf16.mxu0 0
        %1280 = vmatpush1.bf16.msra.mxu0 0
        %1281 = vmatprep.subr.bf16.mxu0 0
        %1282 = vmatpush1.bf16.msra.mxu0 0
        %1283 = vmatprep.subr.bf16.mxu0 0
        %1284 = vmatpush1.bf16.msra.mxu0 0
        %1285 = vmatprep.subr.bf16.mxu0 0
        %1286 = vmatpush1.bf16.msra.mxu0 %v1269
        %1287 = vmatprep.subr.bf16.mxu0 0
        %1288 = vmatpush2.bf16.msra.mxu0 0
        %1289 = vmatprep.subr.bf16.mxu0 0
        %1290 = vmatpush2.bf16.msra.mxu0 0
        %1291 = vmatprep.subr.bf16.mxu0 0
        %1292 = vmatpush2.bf16.msra.mxu0 0
        %1293 = vmatprep.subr.bf16.mxu0 0
        %1294 = vmatpush2.bf16.msra.mxu0 0
        %1295 = vmatprep.subr.bf16.mxu0 0
        %1296 = vmatpush2.bf16.msra.mxu0 0
        %1297 = vmatprep.subr.bf16.mxu0 0
        %1298 = vmatpush2.bf16.msra.mxu0 0
        %1299 = vmatprep.subr.bf16.mxu0 0
        %1300 = vmatpush2.bf16.msra.mxu0 0
        %1301 = vmatprep.subr.bf16.mxu0 0
        %1302 = vmatpush2.bf16.msra.mxu0 0
        %1303 = vmatprep.mubr.bf16.mxu0 0
        %1304 = vmatmul.mubr.bf16.gmra.mxu0 %v1266
        %v1305 = vpop.f32.mrf.mxu0
        %v1306 = vadd.f32 %v1259, %v1305
        %v1307 = vpop.f32.mrf.mxu0
        %v1308 = vpop.f32.mrf.mxu0
        %v1309 = vadd.f32 %v1262, %v1308
        %v1310 = vpop.f32.mrf.mxu0
        %1311 = vdwg.mxu0
        %1312 = vrot.lane.b32.xlu0 %v751, 112
        %v1313 = vpop.permute.xlu0 %1312
        %1314 = vrot.lane.b32.xlu0 %v751, 80
        %v1315 = vpop.permute.xlu0 %1314
        %v1317 = vsel %vm756, %v1313, 0
        %v1320 = vsel %vm756, %v1315, 0
        %1322 = vmatprep.subr.bf16.mxu0 0
        %1323 = vmatpush1.bf16.xpose.msra.mxu0 0
        %1324 = vmatprep.subr.bf16.mxu0 0
        %1325 = vmatpush1.bf16.xpose.msra.mxu0 0
        %1326 = vmatprep.subr.bf16.mxu0 0
        %1327 = vmatpush1.bf16.xpose.msra.mxu0 0
        %1328 = vmatprep.subr.bf16.mxu0 0
        %1329 = vmatpush1.bf16.xpose.msra.mxu0 0
        %1330 = vmatprep.subr.bf16.mxu0 0
        %1331 = vmatpush1.bf16.xpose.msra.mxu0 0
        %1332 = vmatprep.subr.bf16.mxu0 0
        %1333 = vmatpush1.bf16.xpose.msra.mxu0 0
        %1334 = vmatprep.subr.bf16.mxu0 0
        %1335 = vmatpush1.bf16.xpose.msra.mxu0 0
        %1336 = vmatprep.subr.bf16.mxu0 0
        %1337 = vmatpush1.bf16.xpose.msra.mxu0 %v1320
        %1338 = vmatprep.subr.bf16.mxu0 0
        %1339 = vmatpush2.bf16.xpose.msra.mxu0 0
        %1340 = vmatprep.subr.bf16.mxu0 0
        %1341 = vmatpush2.bf16.xpose.msra.mxu0 0
        %1342 = vmatprep.subr.bf16.mxu0 0
        %1343 = vmatpush2.bf16.xpose.msra.mxu0 0
        %1344 = vmatprep.subr.bf16.mxu0 0
        %1345 = vmatpush2.bf16.xpose.msra.mxu0 0
        %1346 = vmatprep.subr.bf16.mxu0 0
        %1347 = vmatpush2.bf16.xpose.msra.mxu0 0
        %1348 = vmatprep.subr.bf16.mxu0 0
        %1349 = vmatpush2.bf16.xpose.msra.mxu0 0
        %1350 = vmatprep.subr.bf16.mxu0 0
        %1351 = vmatpush2.bf16.xpose.msra.mxu0 0
        %1352 = vmatprep.subr.bf16.mxu0 0
        %1353 = vmatpush2.bf16.xpose.msra.mxu0 0
        %1354 = vmatprep.mubr.bf16.mxu0 0
        %1355 = vmatmul.mubr.bf16.gmra.mxu0 %v1317
        %v1356 = vpop.f32.mrf.mxu0
        %v1357 = vadd.f32 0.0, %v1356
        %v1358 = vpop.f32.mrf.mxu0
        %v1359 = vpop.f32.mrf.mxu0
        %v1360 = vpop.f32.mrf.mxu0
        %1361 = vdwg.mxu0
        %1362 = vrot.lane.b32.xlu0 %v752, 112
        %v1363 = vpop.permute.xlu0 %1362
        %1364 = vrot.lane.b32.xlu0 %v752, 80
        %v1365 = vpop.permute.xlu0 %1364
        %v1367 = vsel %vm756, %v1363, 0
        %v1370 = vsel %vm756, %v1365, 0
        %1372 = vmatprep.subr.bf16.mxu0 0
        %1373 = vmatpush1.bf16.xpose.msra.mxu0 0
        %1374 = vmatprep.subr.bf16.mxu0 0
        %1375 = vmatpush1.bf16.xpose.msra.mxu0 0
        %1376 = vmatprep.subr.bf16.mxu0 0
        %1377 = vmatpush1.bf16.xpose.msra.mxu0 0
        %1378 = vmatprep.subr.bf16.mxu0 0
        %1379 = vmatpush1.bf16.xpose.msra.mxu0 0
        %1380 = vmatprep.subr.bf16.mxu0 0
        %1381 = vmatpush1.bf16.xpose.msra.mxu0 0
        %1382 = vmatprep.subr.bf16.mxu0 0
        %1383 = vmatpush1.bf16.xpose.msra.mxu0 0
        %1384 = vmatprep.subr.bf16.mxu0 0
        %1385 = vmatpush1.bf16.xpose.msra.mxu0 0
        %1386 = vmatprep.subr.bf16.mxu0 0
        %1387 = vmatpush1.bf16.xpose.msra.mxu0 %v1370
        %1388 = vmatprep.subr.bf16.mxu0 0
        %1389 = vmatpush2.bf16.xpose.msra.mxu0 0
        %1390 = vmatprep.subr.bf16.mxu0 0
        %1391 = vmatpush2.bf16.xpose.msra.mxu0 0
        %1392 = vmatprep.subr.bf16.mxu0 0
        %1393 = vmatpush2.bf16.xpose.msra.mxu0 0
        %1394 = vmatprep.subr.bf16.mxu0 0
        %1395 = vmatpush2.bf16.xpose.msra.mxu0 0
        %1396 = vmatprep.subr.bf16.mxu0 0
        %1397 = vmatpush2.bf16.xpose.msra.mxu0 0
        %1398 = vmatprep.subr.bf16.mxu0 0
        %1399 = vmatpush2.bf16.xpose.msra.mxu0 0
        %1400 = vmatprep.subr.bf16.mxu0 0
        %1401 = vmatpush2.bf16.xpose.msra.mxu0 0
        %1402 = vmatprep.subr.bf16.mxu0 0
        %1403 = vmatpush2.bf16.xpose.msra.mxu0 0
        %1404 = vmatprep.mubr.bf16.mxu0 0
        %1405 = vmatmul.mubr.bf16.gmra.mxu0 %v1367
        %v1406 = vpop.f32.mrf.mxu0
        %v1407 = vadd.f32 0.0, %v1406
        %v1408 = vpop.f32.mrf.mxu0
        %v1409 = vpop.f32.mrf.mxu0
        %v1410 = vpop.f32.mrf.mxu0
        %1411 = vdwg.mxu0
        %v1412 = vmul.f32 %v1357, 0.35355338
        %v1413 = vmul.f32 %v1407, 0.35355338
        %v1414 = vadd.f32 %v1412, %v859
        %v1415 = vadd.f32 %v1413, %v863
        %v1416 = vsel %vm756, %v1414, -inf
        %1417 = vmax.xlane.f32.xlu0 %v1416
        %v1418 = vpop.xlane.xlu0 %1417
        %v1419 = vsel %vm756, %v1415, -inf
        %1420 = vmax.xlane.f32.xlu0 %v1419
        %v1421 = vpop.xlane.xlu0 %1420
        %v1422 = vsub.f32 %v1414, %v1418
        %v1423 = vsub.f32 %v1415, %v1421
        %v1424 = vmul.f32 %v1422, 1.442695
        %v1425 = vpow.pop %v1424
        %v1426 = vmul.f32 %v1423, 1.442695
        %v1427 = vpow.pop %v1426
        %v1428 = vsel %vm756, %v1425, 0.0
        %1429 = vadd.xlane.f32.xlu0 %v1428
        %v1430 = vpop.xlane.xlu0 %1429
        %v1431 = vsel %vm756, %v1427, 0.0
        %1432 = vadd.xlane.f32.xlu0 %v1431
        %v1433 = vpop.xlane.xlu0 %1432
        %v1434 = vrcp.pop %v1430
        %v1435 = vrcp.pop %v1433
        %v1436 = vmul.f32 %v1425, %v1434
        %v1437 = vmul.f32 %v1427, %v1435
        %v1438 = vpack.c.bf16 %v1436, %v1436
        %v1439 = vpack.c.bf16 %v1437, %v1437
        %1440 = vrot.lane.b32.xlu0 %v751, 48
        %v1441 = vpop.permute.xlu0 %1440
        %v1443 = vsel %vm756, %v1438, 0
        %v1446 = vsel %vm897, %v1441, 0
        %1448 = vmatprep.subr.bf16.mxu0 0
        %1449 = vmatpush1.bf16.msra.mxu0 0
        %1450 = vmatprep.subr.bf16.mxu0 0
        %1451 = vmatpush1.bf16.msra.mxu0 0
        %1452 = vmatprep.subr.bf16.mxu0 0
        %1453 = vmatpush1.bf16.msra.mxu0 0
        %1454 = vmatprep.subr.bf16.mxu0 0
        %1455 = vmatpush1.bf16.msra.mxu0 0
        %1456 = vmatprep.subr.bf16.mxu0 0
        %1457 = vmatpush1.bf16.msra.mxu0 0
        %1458 = vmatprep.subr.bf16.mxu0 0
        %1459 = vmatpush1.bf16.msra.mxu0 0
        %1460 = vmatprep.subr.bf16.mxu0 0
        %1461 = vmatpush1.bf16.msra.mxu0 0
        %1462 = vmatprep.subr.bf16.mxu0 0
        %1463 = vmatpush1.bf16.msra.mxu0 %v1446
        %1464 = vmatprep.subr.bf16.mxu0 0
        %1465 = vmatpush2.bf16.msra.mxu0 0
        %1466 = vmatprep.subr.bf16.mxu0 0
        %1467 = vmatpush2.bf16.msra.mxu0 0
        %1468 = vmatprep.subr.bf16.mxu0 0
        %1469 = vmatpush2.bf16.msra.mxu0 0
        %1470 = vmatprep.subr.bf16.mxu0 0
        %1471 = vmatpush2.bf16.msra.mxu0 0
        %1472 = vmatprep.subr.bf16.mxu0 0
        %1473 = vmatpush2.bf16.msra.mxu0 0
        %1474 = vmatprep.subr.bf16.mxu0 0
        %1475 = vmatpush2.bf16.msra.mxu0 0
        %1476 = vmatprep.subr.bf16.mxu0 0
        %1477 = vmatpush2.bf16.msra.mxu0 0
        %1478 = vmatprep.subr.bf16.mxu0 0
        %1479 = vmatpush2.bf16.msra.mxu0 0
        %1480 = vmatprep.mubr.bf16.mxu0 0
        %1481 = vmatmul.mubr.bf16.gmra.mxu0 %v1443
        %v1482 = vpop.f32.mrf.mxu0
        %v1483 = vadd.f32 0.0, %v1482
        %v1484 = vpop.f32.mrf.mxu0
        %v1485 = vpop.f32.mrf.mxu0
        %v1486 = vpop.f32.mrf.mxu0
        %1487 = vdwg.mxu0
        %1488 = vrot.lane.b32.xlu0 %v752, 48
        %v1489 = vpop.permute.xlu0 %1488
        %v1491 = vsel %vm756, %v1439, 0
        %v1494 = vsel %vm897, %v1489, 0
        %1496 = vmatprep.subr.bf16.mxu0 0
        %1497 = vmatpush1.bf16.msra.mxu0 0
        %1498 = vmatprep.subr.bf16.mxu0 0
        %1499 = vmatpush1.bf16.msra.mxu0 0
        %1500 = vmatprep.subr.bf16.mxu0 0
        %1501 = vmatpush1.bf16.msra.mxu0 0
        %1502 = vmatprep.subr.bf16.mxu0 0
        %1503 = vmatpush1.bf16.msra.mxu0 0
        %1504 = vmatprep.subr.bf16.mxu0 0
        %1505 = vmatpush1.bf16.msra.mxu0 0
        %1506 = vmatprep.subr.bf16.mxu0 0
        %1507 = vmatpush1.bf16.msra.mxu0 0
        %1508 = vmatprep.subr.bf16.mxu0 0
        %1509 = vmatpush1.bf16.msra.mxu0 0
        %1510 = vmatprep.subr.bf16.mxu0 0
        %1511 = vmatpush1.bf16.msra.mxu0 %v1494
        %1512 = vmatprep.subr.bf16.mxu0 0
        %1513 = vmatpush2.bf16.msra.mxu0 0
        %1514 = vmatprep.subr.bf16.mxu0 0
        %1515 = vmatpush2.bf16.msra.mxu0 0
        %1516 = vmatprep.subr.bf16.mxu0 0
        %1517 = vmatpush2.bf16.msra.mxu0 0
        %1518 = vmatprep.subr.bf16.mxu0 0
        %1519 = vmatpush2.bf16.msra.mxu0 0
        %1520 = vmatprep.subr.bf16.mxu0 0
        %1521 = vmatpush2.bf16.msra.mxu0 0
        %1522 = vmatprep.subr.bf16.mxu0 0
        %1523 = vmatpush2.bf16.msra.mxu0 0
        %1524 = vmatprep.subr.bf16.mxu0 0
        %1525 = vmatpush2.bf16.msra.mxu0 0
        %1526 = vmatprep.subr.bf16.mxu0 0
        %1527 = vmatpush2.bf16.msra.mxu0 0
        %1528 = vmatprep.mubr.bf16.mxu0 0
        %1529 = vmatmul.mubr.bf16.gmra.mxu0 %v1491
        %v1530 = vpop.f32.mrf.mxu0
        %v1531 = vadd.f32 0.0, %v1530
        %v1532 = vpop.f32.mrf.mxu0
        %v1533 = vpop.f32.mrf.mxu0
        %v1534 = vpop.f32.mrf.mxu0
        %1535 = vdwg.mxu0
        %v1536 = vpack.c.bf16 %v1531, %v1483
        %s1537 = scalar_lea.vmem %s636, 8
        %v1538 = vld [vmem:[%s1537] sm:$0xf]
        %v1540 = vsel %vm756, %v1536, 0
        %v1543 = vsel %vm897, %v1538, 0
        %1545 = vmatprep.subr.bf16.mxu0 0
        %1546 = vmatpush1.bf16.msra.mxu0 0
        %1547 = vmatprep.subr.bf16.mxu0 0
        %1548 = vmatpush1.bf16.msra.mxu0 0
        %1549 = vmatprep.subr.bf16.mxu0 0
        %1550 = vmatpush1.bf16.msra.mxu0 0
        %1551 = vmatprep.subr.bf16.mxu0 0
        %1552 = vmatpush1.bf16.msra.mxu0 0
        %1553 = vmatprep.subr.bf16.mxu0 0
        %1554 = vmatpush1.bf16.msra.mxu0 0
        %1555 = vmatprep.subr.bf16.mxu0 0
        %1556 = vmatpush1.bf16.msra.mxu0 0
        %1557 = vmatprep.subr.bf16.mxu0 0
        %1558 = vmatpush1.bf16.msra.mxu0 0
        %1559 = vmatprep.subr.bf16.mxu0 0
        %1560 = vmatpush1.bf16.msra.mxu0 %v1543
        %1561 = vmatprep.subr.bf16.mxu0 0
        %1562 = vmatpush2.bf16.msra.mxu0 0
        %1563 = vmatprep.subr.bf16.mxu0 0
        %1564 = vmatpush2.bf16.msra.mxu0 0
        %1565 = vmatprep.subr.bf16.mxu0 0
        %1566 = vmatpush2.bf16.msra.mxu0 0
        %1567 = vmatprep.subr.bf16.mxu0 0
        %1568 = vmatpush2.bf16.msra.mxu0 0
        %1569 = vmatprep.subr.bf16.mxu0 0
        %1570 = vmatpush2.bf16.msra.mxu0 0
        %1571 = vmatprep.subr.bf16.mxu0 0
        %1572 = vmatpush2.bf16.msra.mxu0 0
        %1573 = vmatprep.subr.bf16.mxu0 0
        %1574 = vmatpush2.bf16.msra.mxu0 0
        %1575 = vmatprep.subr.bf16.mxu0 0
        %1576 = vmatpush2.bf16.msra.mxu0 0
        %1577 = vmatprep.mubr.bf16.mxu0 0
        %1578 = vmatmul.mubr.bf16.gmra.mxu0 %v1540
        %v1579 = vpop.f32.mrf.mxu0
        %v1580 = vadd.f32 0.0, %v1579
        %v1581 = vpop.f32.mrf.mxu0
        %v1582 = vpop.f32.mrf.mxu0
        %v1583 = vadd.f32 0.0, %v1582
        %v1584 = vpop.f32.mrf.mxu0
        %1585 = vdwg.mxu0
        %v1586 = vadd.f32 %v1306, %v1580
        %v1587 = vadd.f32 %v1309, %v1583
        %1588 = vrot.lane.b32.xlu0 %v751, 104
        %v1589 = vpop.permute.xlu0 %1588
        %1590 = vrot.lane.b32.xlu0 %v751, 72
        %v1591 = vpop.permute.xlu0 %1590
        %v1593 = vsel %vm756, %v1589, 0
        %v1596 = vsel %vm756, %v1591, 0
        %1598 = vmatprep.subr.bf16.mxu0 0
        %1599 = vmatpush1.bf16.xpose.msra.mxu0 0
        %1600 = vmatprep.subr.bf16.mxu0 0
        %1601 = vmatpush1.bf16.xpose.msra.mxu0 0
        %1602 = vmatprep.subr.bf16.mxu0 0
        %1603 = vmatpush1.bf16.xpose.msra.mxu0 0
        %1604 = vmatprep.subr.bf16.mxu0 0
        %1605 = vmatpush1.bf16.xpose.msra.mxu0 0
        %1606 = vmatprep.subr.bf16.mxu0 0
        %1607 = vmatpush1.bf16.xpose.msra.mxu0 0
        %1608 = vmatprep.subr.bf16.mxu0 0
        %1609 = vmatpush1.bf16.xpose.msra.mxu0 0
        %1610 = vmatprep.subr.bf16.mxu0 0
        %1611 = vmatpush1.bf16.xpose.msra.mxu0 0
        %1612 = vmatprep.subr.bf16.mxu0 0
        %1613 = vmatpush1.bf16.xpose.msra.mxu0 %v1596
        %1614 = vmatprep.subr.bf16.mxu0 0
        %1615 = vmatpush2.bf16.xpose.msra.mxu0 0
        %1616 = vmatprep.subr.bf16.mxu0 0
        %1617 = vmatpush2.bf16.xpose.msra.mxu0 0
        %1618 = vmatprep.subr.bf16.mxu0 0
        %1619 = vmatpush2.bf16.xpose.msra.mxu0 0
        %1620 = vmatprep.subr.bf16.mxu0 0
        %1621 = vmatpush2.bf16.xpose.msra.mxu0 0
        %1622 = vmatprep.subr.bf16.mxu0 0
        %1623 = vmatpush2.bf16.xpose.msra.mxu0 0
        %1624 = vmatprep.subr.bf16.mxu0 0
        %1625 = vmatpush2.bf16.xpose.msra.mxu0 0
        %1626 = vmatprep.subr.bf16.mxu0 0
        %1627 = vmatpush2.bf16.xpose.msra.mxu0 0
        %1628 = vmatprep.subr.bf16.mxu0 0
        %1629 = vmatpush2.bf16.xpose.msra.mxu0 0
        %1630 = vmatprep.mubr.bf16.mxu0 0
        %1631 = vmatmul.mubr.bf16.gmra.mxu0 %v1593
        %v1632 = vpop.f32.mrf.mxu0
        %v1633 = vadd.f32 0.0, %v1632
        %v1634 = vpop.f32.mrf.mxu0
        %v1635 = vpop.f32.mrf.mxu0
        %v1636 = vpop.f32.mrf.mxu0
        %1637 = vdwg.mxu0
        %1638 = vrot.lane.b32.xlu0 %v752, 104
        %v1639 = vpop.permute.xlu0 %1638
        %1640 = vrot.lane.b32.xlu0 %v752, 72
        %v1641 = vpop.permute.xlu0 %1640
        %v1643 = vsel %vm756, %v1639, 0
        %v1646 = vsel %vm756, %v1641, 0
        %1648 = vmatprep.subr.bf16.mxu0 0
        %1649 = vmatpush1.bf16.xpose.msra.mxu0 0
        %1650 = vmatprep.subr.bf16.mxu0 0
        %1651 = vmatpush1.bf16.xpose.msra.mxu0 0
        %1652 = vmatprep.subr.bf16.mxu0 0
        %1653 = vmatpush1.bf16.xpose.msra.mxu0 0
        %1654 = vmatprep.subr.bf16.mxu0 0
        %1655 = vmatpush1.bf16.xpose.msra.mxu0 0
        %1656 = vmatprep.subr.bf16.mxu0 0
        %1657 = vmatpush1.bf16.xpose.msra.mxu0 0
        %1658 = vmatprep.subr.bf16.mxu0 0
        %1659 = vmatpush1.bf16.xpose.msra.mxu0 0
        %1660 = vmatprep.subr.bf16.mxu0 0
        %1661 = vmatpush1.bf16.xpose.msra.mxu0 0
        %1662 = vmatprep.subr.bf16.mxu0 0
        %1663 = vmatpush1.bf16.xpose.msra.mxu0 %v1646
        %1664 = vmatprep.subr.bf16.mxu0 0
        %1665 = vmatpush2.bf16.xpose.msra.mxu0 0
        %1666 = vmatprep.subr.bf16.mxu0 0
        %1667 = vmatpush2.bf16.xpose.msra.mxu0 0
        %1668 = vmatprep.subr.bf16.mxu0 0
        %1669 = vmatpush2.bf16.xpose.msra.mxu0 0
        %1670 = vmatprep.subr.bf16.mxu0 0
        %1671 = vmatpush2.bf16.xpose.msra.mxu0 0
        %1672 = vmatprep.subr.bf16.mxu0 0
        %1673 = vmatpush2.bf16.xpose.msra.mxu0 0
        %1674 = vmatprep.subr.bf16.mxu0 0
        %1675 = vmatpush2.bf16.xpose.msra.mxu0 0
        %1676 = vmatprep.subr.bf16.mxu0 0
        %1677 = vmatpush2.bf16.xpose.msra.mxu0 0
        %1678 = vmatprep.subr.bf16.mxu0 0
        %1679 = vmatpush2.bf16.xpose.msra.mxu0 0
        %1680 = vmatprep.mubr.bf16.mxu0 0
        %1681 = vmatmul.mubr.bf16.gmra.mxu0 %v1643
        %v1682 = vpop.f32.mrf.mxu0
        %v1683 = vadd.f32 0.0, %v1682
        %v1684 = vpop.f32.mrf.mxu0
        %v1685 = vpop.f32.mrf.mxu0
        %v1686 = vpop.f32.mrf.mxu0
        %1687 = vdwg.mxu0
        %v1688 = vmul.f32 %v1633, 0.35355338
        %v1689 = vmul.f32 %v1683, 0.35355338
        %v1690 = vadd.f32 %v1688, %v859
        %v1691 = vadd.f32 %v1689, %v863
        %v1692 = vsel %vm756, %v1690, -inf
        %1693 = vmax.xlane.f32.xlu0 %v1692
        %v1694 = vpop.xlane.xlu0 %1693
        %v1695 = vsel %vm756, %v1691, -inf
        %1696 = vmax.xlane.f32.xlu0 %v1695
        %v1697 = vpop.xlane.xlu0 %1696
        %v1698 = vsub.f32 %v1690, %v1694
        %v1699 = vsub.f32 %v1691, %v1697
        %v1700 = vmul.f32 %v1698, 1.442695
        %v1701 = vpow.pop %v1700
        %v1702 = vmul.f32 %v1699, 1.442695
        %v1703 = vpow.pop %v1702
        %v1704 = vsel %vm756, %v1701, 0.0
        %1705 = vadd.xlane.f32.xlu0 %v1704
        %v1706 = vpop.xlane.xlu0 %1705
        %v1707 = vsel %vm756, %v1703, 0.0
        %1708 = vadd.xlane.f32.xlu0 %v1707
        %v1709 = vpop.xlane.xlu0 %1708
        %v1710 = vrcp.pop %v1706
        %v1711 = vrcp.pop %v1709
        %v1712 = vmul.f32 %v1701, %v1710
        %v1713 = vmul.f32 %v1703, %v1711
        %v1714 = vpack.c.bf16 %v1712, %v1712
        %v1715 = vpack.c.bf16 %v1713, %v1713
        %1716 = vrot.lane.b32.xlu0 %v751, 40
        %v1717 = vpop.permute.xlu0 %1716
        %v1719 = vsel %vm756, %v1714, 0
        %v1722 = vsel %vm897, %v1717, 0
        %1724 = vmatprep.subr.bf16.mxu0 0
        %1725 = vmatpush1.bf16.msra.mxu0 0
        %1726 = vmatprep.subr.bf16.mxu0 0
        %1727 = vmatpush1.bf16.msra.mxu0 0
        %1728 = vmatprep.subr.bf16.mxu0 0
        %1729 = vmatpush1.bf16.msra.mxu0 0
        %1730 = vmatprep.subr.bf16.mxu0 0
        %1731 = vmatpush1.bf16.msra.mxu0 0
        %1732 = vmatprep.subr.bf16.mxu0 0
        %1733 = vmatpush1.bf16.msra.mxu0 0
        %1734 = vmatprep.subr.bf16.mxu0 0
        %1735 = vmatpush1.bf16.msra.mxu0 0
        %1736 = vmatprep.subr.bf16.mxu0 0
        %1737 = vmatpush1.bf16.msra.mxu0 0
        %1738 = vmatprep.subr.bf16.mxu0 0
        %1739 = vmatpush1.bf16.msra.mxu0 %v1722
        %1740 = vmatprep.subr.bf16.mxu0 0
        %1741 = vmatpush2.bf16.msra.mxu0 0
        %1742 = vmatprep.subr.bf16.mxu0 0
        %1743 = vmatpush2.bf16.msra.mxu0 0
        %1744 = vmatprep.subr.bf16.mxu0 0
        %1745 = vmatpush2.bf16.msra.mxu0 0
        %1746 = vmatprep.subr.bf16.mxu0 0
        %1747 = vmatpush2.bf16.msra.mxu0 0
        %1748 = vmatprep.subr.bf16.mxu0 0
        %1749 = vmatpush2.bf16.msra.mxu0 0
        %1750 = vmatprep.subr.bf16.mxu0 0
        %1751 = vmatpush2.bf16.msra.mxu0 0
        %1752 = vmatprep.subr.bf16.mxu0 0
        %1753 = vmatpush2.bf16.msra.mxu0 0
        %1754 = vmatprep.subr.bf16.mxu0 0
        %1755 = vmatpush2.bf16.msra.mxu0 0
        %1756 = vmatprep.mubr.bf16.mxu0 0
        %1757 = vmatmul.mubr.bf16.gmra.mxu0 %v1719
        %v1758 = vpop.f32.mrf.mxu0
        %v1759 = vadd.f32 0.0, %v1758
        %v1760 = vpop.f32.mrf.mxu0
        %v1761 = vpop.f32.mrf.mxu0
        %v1762 = vpop.f32.mrf.mxu0
        %1763 = vdwg.mxu0
        %1764 = vrot.lane.b32.xlu0 %v752, 40
        %v1765 = vpop.permute.xlu0 %1764
        %v1767 = vsel %vm756, %v1715, 0
        %v1770 = vsel %vm897, %v1765, 0
        %1772 = vmatprep.subr.bf16.mxu0 0
        %1773 = vmatpush1.bf16.msra.mxu0 0
        %1774 = vmatprep.subr.bf16.mxu0 0
        %1775 = vmatpush1.bf16.msra.mxu0 0
        %1776 = vmatprep.subr.bf16.mxu0 0
        %1777 = vmatpush1.bf16.msra.mxu0 0
        %1778 = vmatprep.subr.bf16.mxu0 0
        %1779 = vmatpush1.bf16.msra.mxu0 0
        %1780 = vmatprep.subr.bf16.mxu0 0
        %1781 = vmatpush1.bf16.msra.mxu0 0
        %1782 = vmatprep.subr.bf16.mxu0 0
        %1783 = vmatpush1.bf16.msra.mxu0 0
        %1784 = vmatprep.subr.bf16.mxu0 0
        %1785 = vmatpush1.bf16.msra.mxu0 0
        %1786 = vmatprep.subr.bf16.mxu0 0
        %1787 = vmatpush1.bf16.msra.mxu0 %v1770
        %1788 = vmatprep.subr.bf16.mxu0 0
        %1789 = vmatpush2.bf16.msra.mxu0 0
        %1790 = vmatprep.subr.bf16.mxu0 0
        %1791 = vmatpush2.bf16.msra.mxu0 0
        %1792 = vmatprep.subr.bf16.mxu0 0
        %1793 = vmatpush2.bf16.msra.mxu0 0
        %1794 = vmatprep.subr.bf16.mxu0 0
        %1795 = vmatpush2.bf16.msra.mxu0 0
        %1796 = vmatprep.subr.bf16.mxu0 0
        %1797 = vmatpush2.bf16.msra.mxu0 0
        %1798 = vmatprep.subr.bf16.mxu0 0
        %1799 = vmatpush2.bf16.msra.mxu0 0
        %1800 = vmatprep.subr.bf16.mxu0 0
        %1801 = vmatpush2.bf16.msra.mxu0 0
        %1802 = vmatprep.subr.bf16.mxu0 0
        %1803 = vmatpush2.bf16.msra.mxu0 0
        %1804 = vmatprep.mubr.bf16.mxu0 0
        %1805 = vmatmul.mubr.bf16.gmra.mxu0 %v1767
        %v1806 = vpop.f32.mrf.mxu0
        %v1807 = vadd.f32 0.0, %v1806
        %v1808 = vpop.f32.mrf.mxu0
        %v1809 = vpop.f32.mrf.mxu0
        %v1810 = vpop.f32.mrf.mxu0
        %1811 = vdwg.mxu0
        %v1812 = vpack.c.bf16 %v1807, %v1759
        %s1813 = scalar_lea.vmem %s636, 12
        %v1814 = vld [vmem:[%s1813] sm:$0xf]
        %v1816 = vsel %vm756, %v1812, 0
        %v1819 = vsel %vm897, %v1814, 0
        %1821 = vmatprep.subr.bf16.mxu0 0
        %1822 = vmatpush1.bf16.msra.mxu0 0
        %1823 = vmatprep.subr.bf16.mxu0 0
        %1824 = vmatpush1.bf16.msra.mxu0 0
        %1825 = vmatprep.subr.bf16.mxu0 0
        %1826 = vmatpush1.bf16.msra.mxu0 0
        %1827 = vmatprep.subr.bf16.mxu0 0
        %1828 = vmatpush1.bf16.msra.mxu0 0
        %1829 = vmatprep.subr.bf16.mxu0 0
        %1830 = vmatpush1.bf16.msra.mxu0 0
        %1831 = vmatprep.subr.bf16.mxu0 0
        %1832 = vmatpush1.bf16.msra.mxu0 0
        %1833 = vmatprep.subr.bf16.mxu0 0
        %1834 = vmatpush1.bf16.msra.mxu0 0
        %1835 = vmatprep.subr.bf16.mxu0 0
        %1836 = vmatpush1.bf16.msra.mxu0 %v1819
        %1837 = vmatprep.subr.bf16.mxu0 0
        %1838 = vmatpush2.bf16.msra.mxu0 0
        %1839 = vmatprep.subr.bf16.mxu0 0
        %1840 = vmatpush2.bf16.msra.mxu0 0
        %1841 = vmatprep.subr.bf16.mxu0 0
        %1842 = vmatpush2.bf16.msra.mxu0 0
        %1843 = vmatprep.subr.bf16.mxu0 0
        %1844 = vmatpush2.bf16.msra.mxu0 0
        %1845 = vmatprep.subr.bf16.mxu0 0
        %1846 = vmatpush2.bf16.msra.mxu0 0
        %1847 = vmatprep.subr.bf16.mxu0 0
        %1848 = vmatpush2.bf16.msra.mxu0 0
        %1849 = vmatprep.subr.bf16.mxu0 0
        %1850 = vmatpush2.bf16.msra.mxu0 0
        %1851 = vmatprep.subr.bf16.mxu0 0
        %1852 = vmatpush2.bf16.msra.mxu0 0
        %1853 = vmatprep.mubr.bf16.mxu0 0
        %1854 = vmatmul.mubr.bf16.gmra.mxu0 %v1816
        %v1855 = vpop.f32.mrf.mxu0
        %v1856 = vadd.f32 0.0, %v1855
        %v1857 = vpop.f32.mrf.mxu0
        %v1858 = vpop.f32.mrf.mxu0
        %v1859 = vadd.f32 0.0, %v1858
        %v1860 = vpop.f32.mrf.mxu0
        %1861 = vdwg.mxu0
        %v1862 = vadd.f32 %v1586, %v1856
        %v1863 = vadd.f32 %v1587, %v1859
        %v1864 = vld [vmem:[%s639] sm:$0x1]
        %v1866 = vlaneseq
        %v1867 = vshrl.u32 %v1866, 7
        %v1868 = vsub.s32 0, %v1867
        %v1869 = vrot.slane %v1864, %v1868
        %v1871 = vadd.f32 %v1862, %v1869
        %v1872 = vadd.f32 %v1863, %v1869
        %v1873 = vadd.f32 %v1871, %v678
        %v1874 = vadd.f32 %v1872, %v679
        %v1875 = vld [vmem:[%s642] sm:$0x1]
        %v1876 = vld [vmem:[%s645] sm:$0x1]
        %v1877 = vsel %vm706, %v1873, 0.0
        %1878 = vadd.xlane.f32.xlu0 %v1877
        %v1879 = vpop.xlane.xlu0 %1878
        %v1880 = vsel %vm706, %v1874, 0.0
        %1881 = vadd.xlane.f32.xlu0 %v1880
        %v1882 = vpop.xlane.xlu0 %1881
        %v1883 = vrcp.pop 32.0
        %v1884 = vmul.f32 %v1879, %v1883
        %v1885 = vmul.f32 %v1882, %v1883
        %v1886 = vsub.f32 %v1873, %v1884
        %v1887 = vsub.f32 %v1874, %v1885
        %v1888 = vmul.f32 %v1886, %v1886
        %v1889 = vmul.f32 %v1887, %v1887
        %v1890 = vsel %vm706, %v1888, 0.0
        %1891 = vadd.xlane.f32.xlu0 %v1890
        %v1892 = vpop.xlane.xlu0 %1891
        %v1893 = vsel %vm706, %v1889, 0.0
        %1894 = vadd.xlane.f32.xlu0 %v1893
        %v1895 = vpop.xlane.xlu0 %1894
        %v1896 = vmul.f32 %v1892, %v1883
        %v1897 = vmul.f32 %v1895, %v1883
        %v1898 = vadd.f32 %v1896, 1e-12
        %v1899 = vadd.f32 %v1897, 1e-12
        %v1900 = vrsqrt.pop %v1898
        %v1901 = vrsqrt.pop %v1899
        %v1902 = vmul.f32 %v1886, %v1900
        %v1903 = vmul.f32 %v1887, %v1901
        %v1905 = vlaneseq
        %v1906 = vshrl.u32 %v1905, 7
        %v1907 = vsub.s32 0, %v1906
        %v1908 = vrot.slane %v1875, %v1907
        %v1910 = vmul.f32 %v1902, %v1908
        %v1911 = vmul.f32 %v1903, %v1908
        %v1913 = vlaneseq
        %v1914 = vshrl.u32 %v1913, 7
        %v1915 = vsub.s32 0, %v1914
        %v1916 = vrot.slane %v1876, %v1915
        %v1918 = vadd.f32 %v1910, %v1916
        %v1919 = vadd.f32 %v1911, %v1916
        %v1920 = vpack.c.bf16 %v1919, %v1918
        %v1921 = vld [vmem:[%s650] sm:$0xf]
        %v1922 = vld [vmem:[%s650 + $0x4] sm:$0xf]
        %v1923 = vld [vmem:[%s650 + $0x8] sm:$0xf]
        %v1924 = vld [vmem:[%s650 + $0xc] sm:$0xf]
        %v1925 = vld [vmem:[%s653] sm:$0x1]
        %v1927 = vlaneseq
        %v1928 = vshrl.u32 %v1927, 7
        %v1929 = vsub.s32 0, %v1928
        %v1930 = vrot.slane %v1925, %v1929
        %v1936 = vunpack.c.l.b16 %v1921
        %v1937 = vunpack.c.l.b16 %v1922
        %v1938 = vunpack.c.l.b16 %v1923
        %v1939 = vunpack.c.l.b16 %v1924
        %v1940 = vpack.c.b16 %v1937, %v1936
        %v1941 = vpack.c.b16 %v1939, %v1938
        %v1945 = vsel %vm706, %v1920, 0
        %1947 = vmatprep.subr.bf16.mxu0 0
        %1948 = vmatpush1.bf16.msra.mxu0 0
        %1949 = vmatprep.subr.bf16.mxu0 0
        %1950 = vmatpush1.bf16.msra.mxu0 0
        %1951 = vmatprep.subr.bf16.mxu0 0
        %1952 = vmatpush1.bf16.msra.mxu0 0
        %1953 = vmatprep.subr.bf16.mxu0 0
        %1954 = vmatpush1.bf16.msra.mxu0 0
        %1955 = vmatprep.subr.bf16.mxu0 0
        %1956 = vmatpush1.bf16.msra.mxu0 0
        %1957 = vmatprep.subr.bf16.mxu0 0
        %1958 = vmatpush1.bf16.msra.mxu0 0
        %1959 = vmatprep.subr.bf16.mxu0 0
        %1960 = vmatpush1.bf16.msra.mxu0 %v1941
        %1961 = vmatprep.subr.bf16.mxu0 0
        %1962 = vmatpush1.bf16.msra.mxu0 %v1940
        %1963 = vmatprep.subr.bf16.mxu0 0
        %1964 = vmatpush2.bf16.msra.mxu0 0
        %1965 = vmatprep.subr.bf16.mxu0 0
        %1966 = vmatpush2.bf16.msra.mxu0 0
        %1967 = vmatprep.subr.bf16.mxu0 0
        %1968 = vmatpush2.bf16.msra.mxu0 0
        %1969 = vmatprep.subr.bf16.mxu0 0
        %1970 = vmatpush2.bf16.msra.mxu0 0
        %1971 = vmatprep.subr.bf16.mxu0 0
        %1972 = vmatpush2.bf16.msra.mxu0 0
        %1973 = vmatprep.subr.bf16.mxu0 0
        %1974 = vmatpush2.bf16.msra.mxu0 0
        %1975 = vmatprep.subr.bf16.mxu0 0
        %1976 = vmatpush2.bf16.msra.mxu0 0
        %1977 = vmatprep.subr.bf16.mxu0 0
        %1978 = vmatpush2.bf16.msra.mxu0 0
        %1979 = vmatprep.mubr.bf16.mxu0 0
        %1980 = vmatmul.mubr.bf16.gmra.mxu0 %v1945
        %v1981 = vpop.f32.mrf.mxu0
        %v1982 = vadd.f32 %v1930, %v1981
        %v1983 = vpop.f32.mrf.mxu0
        %v1984 = vpop.f32.mrf.mxu0
        %v1985 = vadd.f32 %v1930, %v1984
        %v1986 = vpop.f32.mrf.mxu0
        %1987 = vdwg.mxu0
        %v1988 = vmul.f32 %v1982, 0.5
        %v1989 = vmul.f32 %v1985, 0.5
        %v1990 = vmul.f32 %v1982, 0.70710677
        %v1991 = vmul.f32 %v1985, 0.70710677
        %v1992 = verf.f32.pop %v1990
        %v1993 = verf.f32.pop %v1991
        %v1994 = vadd.f32 %v1992, 1.0
        %v1995 = vadd.f32 %v1993, 1.0
        %v1996 = vmul.f32 %v1988, %v1994
        %v1997 = vmul.f32 %v1989, %v1995
        %v1998 = vpack.c.bf16 %v1997, %v1996
        %v1999 = vld [vmem:[%s658] sm:$0xf]
        %v2000 = vld [vmem:[%s658 + $0x4] sm:$0xf]
        %v2001 = vld [vmem:[%s658 + $0x8] sm:$0xf]
        %v2002 = vld [vmem:[%s658 + $0xc] sm:$0xf]
        %v2003 = vld [vmem:[%s658 + $0x10] sm:$0xf]
        %v2004 = vld [vmem:[%s658 + $0x14] sm:$0xf]
        %v2005 = vld [vmem:[%s658 + $0x18] sm:$0xf]
        %v2006 = vld [vmem:[%s658 + $0x1c] sm:$0xf]
        %v2007 = vld [vmem:[%s661] sm:$0x1]
        %v2009 = vlaneseq
        %v2010 = vshrl.u32 %v2009, 7
        %v2011 = vsub.s32 0, %v2010
        %v2012 = vrot.slane %v2007, %v2011
        %v2022 = vunpack.c.l.b16 %v1999
        %v2023 = vunpack.c.l.b16 %v2000
        %v2024 = vunpack.c.l.b16 %v2001
        %v2025 = vunpack.c.l.b16 %v2002
        %v2026 = vunpack.c.l.b16 %v2003
        %v2027 = vunpack.c.l.b16 %v2004
        %v2028 = vunpack.c.l.b16 %v2005
        %v2029 = vunpack.c.l.b16 %v2006
        %v2030 = vpack.c.b16 %v2023, %v2022
        %v2031 = vpack.c.b16 %v2025, %v2024
        %v2032 = vpack.c.b16 %v2027, %v2026
        %v2033 = vpack.c.b16 %v2029, %v2028
        %vm2038 = vcmask 523264
        %v2040 = vsel %vm2038, %v1998, 0
        %2042 = vmatprep.subr.bf16.mxu0 0
        %2043 = vmatpush1.bf16.msra.mxu0 0
        %2044 = vmatprep.subr.bf16.mxu0 0
        %2045 = vmatpush1.bf16.msra.mxu0 0
        %2046 = vmatprep.subr.bf16.mxu0 0
        %2047 = vmatpush1.bf16.msra.mxu0 0
        %2048 = vmatprep.subr.bf16.mxu0 0
        %2049 = vmatpush1.bf16.msra.mxu0 0
        %2050 = vmatprep.subr.bf16.mxu0 0
        %2051 = vmatpush1.bf16.msra.mxu0 %v2033
        %2052 = vmatprep.subr.bf16.mxu0 0
        %2053 = vmatpush1.bf16.msra.mxu0 %v2032
        %2054 = vmatprep.subr.bf16.mxu0 0
        %2055 = vmatpush1.bf16.msra.mxu0 %v2031
        %2056 = vmatprep.subr.bf16.mxu0 0
        %2057 = vmatpush1.bf16.msra.mxu0 %v2030
        %2058 = vmatprep.subr.bf16.mxu0 0
        %2059 = vmatpush2.bf16.msra.mxu0 0
        %2060 = vmatprep.subr.bf16.mxu0 0
        %2061 = vmatpush2.bf16.msra.mxu0 0
        %2062 = vmatprep.subr.bf16.mxu0 0
        %2063 = vmatpush2.bf16.msra.mxu0 0
        %2064 = vmatprep.subr.bf16.mxu0 0
        %2065 = vmatpush2.bf16.msra.mxu0 0
        %2066 = vmatprep.subr.bf16.mxu0 0
        %2067 = vmatpush2.bf16.msra.mxu0 0
        %2068 = vmatprep.subr.bf16.mxu0 0
        %2069 = vmatpush2.bf16.msra.mxu0 0
        %2070 = vmatprep.subr.bf16.mxu0 0
        %2071 = vmatpush2.bf16.msra.mxu0 0
        %2072 = vmatprep.subr.bf16.mxu0 0
        %2073 = vmatpush2.bf16.msra.mxu0 0
        %2074 = vmatprep.mubr.bf16.mxu0 0
        %2075 = vmatmul.mubr.bf16.gmra.mxu0 %v2040
        %v2076 = vpop.f32.mrf.mxu0
        %v2077 = vadd.f32 %v2012, %v2076
        %v2078 = vpop.f32.mrf.mxu0
        %v2079 = vpop.f32.mrf.mxu0
        %v2080 = vadd.f32 %v2012, %v2079
        %v2081 = vpop.f32.mrf.mxu0
        %2082 = vdwg.mxu0
        %v2083 = vadd.f32 %v2077, %v1918
        %v2084 = vadd.f32 %v2080, %v1919
        %v2085 = vld [vmem:[%s664] sm:$0x1]
        %v2086 = vld [vmem:[%s667] sm:$0x1]
        %v2087 = vsel %vm706, %v2083, 0.0
        %2088 = vadd.xlane.f32.xlu0 %v2087
        %v2089 = vpop.xlane.xlu0 %2088
        %v2090 = vsel %vm706, %v2084, 0.0
        %2091 = vadd.xlane.f32.xlu0 %v2090
        %v2092 = vpop.xlane.xlu0 %2091
        %v2093 = vmul.f32 %v2089, %v1883
        %v2094 = vmul.f32 %v2092, %v1883
        %v2095 = vsub.f32 %v2083, %v2093
        %v2096 = vsub.f32 %v2084, %v2094
        %v2097 = vmul.f32 %v2095, %v2095
        %v2098 = vmul.f32 %v2096, %v2096
        %v2099 = vsel %vm706, %v2097, 0.0
        %2100 = vadd.xlane.f32.xlu0 %v2099
        %v2101 = vpop.xlane.xlu0 %2100
        %v2102 = vsel %vm706, %v2098, 0.0
        %2103 = vadd.xlane.f32.xlu0 %v2102
        %v2104 = vpop.xlane.xlu0 %2103
        %v2105 = vmul.f32 %v2101, %v1883
        %v2106 = vmul.f32 %v2104, %v1883
        %v2107 = vadd.f32 %v2105, 1e-12
        %v2108 = vadd.f32 %v2106, 1e-12
        %v2109 = vrsqrt.pop %v2107
        %v2110 = vrsqrt.pop %v2108
        %v2111 = vmul.f32 %v2095, %v2109
        %v2112 = vmul.f32 %v2096, %v2110
        %v2114 = vlaneseq
        %v2115 = vshrl.u32 %v2114, 7
        %v2116 = vsub.s32 0, %v2115
        %v2117 = vrot.slane %v2085, %v2116
        %v2119 = vmul.f32 %v2111, %v2117
        %v2120 = vmul.f32 %v2112, %v2117
        %v2122 = vlaneseq
        %v2123 = vshrl.u32 %v2122, 7
        %v2124 = vsub.s32 0, %v2123
        %v2125 = vrot.slane %v2086, %v2124
        %v2127 = vadd.f32 %v2119, %v2125
        %v2128 = vadd.f32 %v2120, %v2125
        %2129 = vst.msk [vmem:[#allocation2] sm:$0xff] %vm706, %v2127
        %2130 = vst.msk [vmem:[#allocation2 + $0x8] sm:$0xff] %vm706, %v2128
        %2131 = vst.msk [vmem:[%s623] sm:$0xff] %vm706, %v2127
        %2132 = vst.msk [vmem:[%s623 + $0x8] sm:$0xff] %vm706, %v2128
        %s2133 = sand.u32 %s392, 1
        %s2134 = scalar_lea.sflag [#allocation5], %s2133
        %s2135 = sand.u32 %s392, 1
        %s2136 = smul.addr %s2135, 16
        %s2137 = scalar_lea.vmem [#allocation8], %s2136
        // Predicated region
        $region89: #{tpu_custom_call.1} parent=75 // pred_check
          %p2138 = pneg %p402
        $region90: #{tpu_custom_call.1} parent=75 // pred_check_branch
          %2140 = sbr.rel (%p2138) target = $region92
        $region91: #{tpu_custom_call.1} parent=75 // pred_region
          %s2142 = ssub.s32 256, 256
          %2143 = vsyncadd %s2134, %s2142
          %s2144 = smul.addr %s30, 2
          %s2145 = smul.addr %s2144, 128
          %s2146 = scalar_lea.hbm %s14, %s2145
          %s2147 = sshll.u32 %s2137, 4
          %s2148 = int_to_ptr.vmem [resolvable:$true] %s2147
          %2153 = dma.vmem_to_hbm [thread:$0]  %s2148, 256, %s2146, %s2134, 128, 128, 8
        $region92: #{tpu_custom_call.1} parent=75 // pred_fallthru
          _
      $region76: #{tpu_custom_call.1} parent=5 // pred_fallthru
        _
      %p2154 = scmp.le.s32.totalorder 2, %s25
      // Predicated region
      $region93: #{tpu_custom_call.1} parent=5 // pred_check
        %p2155 = pneg %p2154
      $region94: #{tpu_custom_call.1} parent=5 // pred_check_branch
        %2157 = sbr.rel (%p2155) target = $region96
      $region95: #{tpu_custom_call.1} parent=5 // pred_region
        %s2158 = ssub.s32 %s25, 2
        // Predicated region
        $region97: #{tpu_custom_call.1} parent=95 // pred_check
          %p2159 = pneg %p408
        $region98: #{tpu_custom_call.1} parent=95 // pred_check_branch
          %2161 = sbr.rel (%p2159) target = $region100
        $region99: #{tpu_custom_call.1} parent=95 // pred_region
          %s2162 = sand.u32 %s393, 1
          %s2163 = scalar_lea.sflag [#allocation5], %s2162
          %s2164 = sand.u32 %s393, 1
          %s2165 = smul.addr %s2164, 16
          %s2166 = scalar_lea.vmem [#allocation8], %s2165
          %2167 = dma.done %s2163, 256
        $region100: #{tpu_custom_call.1} parent=95 // pred_fallthru
          _
      $region96: #{tpu_custom_call.1} parent=5 // pred_fallthru
        _
    $region6: #{tpu_custom_call.1} parent=1 // loop_footer
      %s29 = sadd.s32 1, %s25
    $region7: #{tpu_custom_call.1} parent=1 // loop_footer_branch
      %24 = sbr.rel target = $region3
    $region8: #{tpu_custom_call.1} parent=1 // loop_exit
      _
    %2168 = vsyncpa [#allocation4], 1
    %s2169 = scalar_lea.sflag [#allocation4], 1
    %2170 = vsyncpa %s2169, 1
    %2171 = vsyncpa [#allocation7], 1
    %2172 = vsyncpa [#allocation5], 1
    %s2173 = scalar_lea.sflag [#allocation5], 1
    %2174 = vsyncpa %s2173, 1

</llo_original>
